<compile_context>
chip_gen: v5e
topology: v5e:2x2
jax: 0.10.0
libtpu: 0.0.40
codegen_flags: <defaults>
</compile_context>

<pallas_src>
import functools
import math

import jax
import jax.numpy as jnp
from jax.experimental import pallas as pl
from jax.experimental.pallas import tpu as pltpu

KSIZE = 5
STRIDE = 2
PAD = 2
N_TAPS = KSIZE * KSIZE


def _out_size(h):
    return (h + 2 * PAD - KSIZE) // STRIDE + 1


def _phase_decompose(x_nhwc, ho, wo):
    """(N,H,W,C) -> (N, Ho+2, 4*(Wo+2), C) bf16 stride-2 phase planes.

    plane[n, i, (2p+q)*(Wo+2) + j, c] == padded_x[n, 2i+p, 2j+q, c], where
    padded_x has PAD=2 rows/cols of zeros on the top/left.  Every 5x5 tap of the
    stride-2 conv then becomes a static, unit-stride slice of the in-VMEM band.
    Values are exact small integers (<= ~255), so bf16 is lossless.
    """
    n, h, w, c = x_nhwc.shape
    hp2, wp2 = ho + 2, wo + 2
    xp = jnp.pad(x_nhwc, ((0, 0),
                          (PAD, 2 * hp2 - h - PAD),
                          (PAD, 2 * wp2 - w - PAD),
                          (0, 0)))
    xp = xp.reshape(n, hp2, 2, wp2, 2, c).transpose(0, 1, 2, 4, 3, 5)
    return xp.reshape(n, hp2, 4 * wp2, c).astype(jnp.bfloat16)


def _vmem_estimate(th, wo, wp2, cin, cout, gk, w_bytes, out_bytes):
    band = (th + 2) * 4 * wp2 * cin * 2              # one bf16 halo-band block
    outb = th * wo * cout * out_bytes                # one output block
    temps = th * wo * (cout * 4 + gk * 2) + band     # f32 acc + grouped-K operand
    return 2 * band + 2 * outb + 2 * w_bytes + temps


def _pick_th(n_batch, ho, wo, wp2, cin, cout, gk, w_bytes, out_bytes):
    """Largest divisor of Ho giving ~<=2048 GEMM rows within the VMEM budget."""
    tmax = max(1, 2048 // max(wo, 1))
    if n_batch <= 2 and ho >= 2:
        # keep >= 2 row blocks so both v7x TensorCores get work at tiny batch
        tmax = min(tmax, max(1, ho // 2))
    budget = 20 * 2 ** 20
    th = 1
    for d in range(1, ho + 1):
        if ho % d == 0 and d <= tmax and \
                _vmem_estimate(d, wo, wp2, cin, cout, gk, w_bytes, out_bytes) <= budget:
            th = d
    return th, ho // th


def _conv_quant_kernel(x_ref, w_ref, mul_ref, bmul_ref, o_ref, *,
                       th, wo, wp2, cin, cout, tpg, n_groups,
                       inv_div1, clp, scl, inv_div2, is_last):
    """One (batch, row-block) step: grouped-K in-VMEM im2col conv + quantize."""

    def tap_slice(t):
        t = min(t, N_TAPS - 1)                 # zero-padded taps have zero weights
        kh, kw = divmod(t, KSIZE)
        p, q = kh % 2, kw % 2
        dh, dw = kh // 2, kw // 2
        c0 = (2 * p + q) * wp2 + dw
        return x_ref[dh:dh + th, c0:c0 + wo, :]            # (th, wo, cin) bf16

    acc = None
    for g in range(n_groups):
        parts = [tap_slice(g * tpg + j) for j in range(tpg)]
        op = parts[0] if tpg == 1 else jnp.concatenate(parts, axis=-1)
        op = op.reshape(th * wo, tpg * cin)
        part = jnp.dot(op, w_ref[g], preferred_element_type=jnp.float32)
        acc = part if acc is None else acc + part

    # bias pre-folded:  y = conv*mul + round(bias)*mul
    y = acc * mul_ref[...] + bmul_ref[...]
    # floorSTE((y + d/2) / d) == floor(y * (1/d) + 0.5)   (d is a power of two)
    y = jnp.floor(y * inv_div1 + 0.5)
    if not is_last:
        y = jnp.clip(y, 0.0, clp)
        y = jnp.floor(jnp.round(y * scl) * inv_div2 + 0.5)
    # TODO(synk): a lane-dense (wo*cout) output packing would avoid masked partial
    #             stores for Cout=192/320 (largest remaining v5e store cost).
    o_ref[...] = y.reshape(1, th, wo, cout).astype(o_ref.dtype)


def _conv_quant_layer(x_nhwc, w, b, mul, *, div1, clp, scl, div2, is_last):
    n, h, wd, cin = x_nhwc.shape
    cout = w.shape[0]
    ho, wo = _out_size(h), _out_size(wd)
    wp2 = wo + 2

    # ---- tap grouping along K so each matmul fills the MXU depth (~<=512) ----
    tpg = max(1, min(N_TAPS, 512 // max(cin, 1)))          # taps per matmul group
    n_groups = -(-N_TAPS // tpg)
    gk = tpg * cin

    # ---- grouped tap weights: (n_groups, tpg*Cin, Cout) bf16, zero-pad taps ----
    w_taps = jnp.round(w).transpose(2, 3, 1, 0).reshape(N_TAPS, cin, cout)
    pad_taps = n_groups * tpg - N_TAPS
    if pad_taps:
        w_taps = jnp.concatenate(
            [w_taps, jnp.zeros((pad_taps, cin, cout), w_taps.dtype)], axis=0)
    w_grp = w_taps.reshape(n_groups, gk, cout).astype(jnp.bfloat16)
    w_bytes = int(w_grp.size) * 2

    out_bytes = 4 if is_last else 2
    th, nrb = _pick_th(n, ho, wo, wp2, cin, cout, gk, w_bytes, out_bytes)

    # ---- banded phase planes (halo rows duplicated) so plain BlockSpec
    #      auto-pipelining double-buffers the band DMA across grid steps ----
    # TODO(synk): emit the *next* layer's banded phase-plane layout directly from
    #             the kernel epilogue to remove this XLA re-layout pass entirely.
    x_ph = _phase_decompose(x_nhwc, ho, wo)                # (N, Ho+2, 4*wp2, Cin)
    row_idx = (jnp.arange(nrb) * th)[:, None] + jnp.arange(th + 2)[None, :]
    x_band = x_ph[:, row_idx]                              # (N, nrb, th+2, 4*wp2, Cin)

    mul_row = mul.reshape(1, cout).astype(jnp.float32)
    bmul_row = (jnp.round(b) * mul).reshape(1, cout).astype(jnp.float32)

    kernel = functools.partial(
        _conv_quant_kernel, th=th, wo=wo, wp2=wp2, cin=cin, cout=cout,
        tpg=tpg, n_groups=n_groups,
        inv_div1=1.0 / div1, clp=clp, scl=scl, inv_div2=1.0 / div2,
        is_last=is_last)

    out_dtype = jnp.float32 if is_last else jnp.bfloat16
    vmem_need = _vmem_estimate(th, wo, wp2, cin, cout, gk, w_bytes, out_bytes)
    vmem_limit = int(min(48 * 2 ** 20, max(24 * 2 ** 20, 2 * vmem_need)))
    cost = pl.CostEstimate(
        flops=2 * n * ho * wo * N_TAPS * cin * cout,
        transcendentals=0,
        bytes_accessed=int(x_band.size) * 2 + w_bytes
                       + n * ho * wo * cout * out_bytes)

    out = pl.pallas_call(
        kernel,
        out_shape=jax.ShapeDtypeStruct((n, ho, wo, cout), out_dtype),
        grid=(n, nrb),
        in_specs=[
            pl.BlockSpec((None, None, th + 2, 4 * wp2, cin),
                         lambda i, r: (i, r, 0, 0, 0)),
            pl.BlockSpec((n_groups, gk, cout), lambda i, r: (0, 0, 0)),
            pl.BlockSpec((1, cout), lambda i, r: (0, 0)),
            pl.BlockSpec((1, cout), lambda i, r: (0, 0)),
        ],
        out_specs=pl.BlockSpec((1, th, wo, cout), lambda i, r: (i, r, 0, 0)),
        compiler_params=pltpu.CompilerParams(
            dimension_semantics=("parallel", "parallel"),
            vmem_limit_bytes=vmem_limit),
        cost_estimate=cost,
    )(x_band, w_grp, mul_row, bmul_row)
    return out                                             # NHWC (bf16 or f32)


def analysis_net_forward(x_nchw, params, muls, relus, Bits=8):
    """Pallas implementation of Analysis_net.forward (if_int16=False path)."""
    (w1, b1), (w2, b2), (w3, b3), (w4, b4) = params
    clp_k, in_scale, scl_k, delta_dvd = 7, 8, 4, 0

    clp = [round((math.pow(2.0, Bits) - 1) / relus[i] * 2 ** (16 + clp_k))
           for i in range(len(relus))]
    scl_q = [math.floor((relus[i] + 2 ** (scl_k - 1)) / 2 ** scl_k) for i in range(3)]

    # input quantization:  clip(round(x * 2^in_scale), 0, 255)
    x = jnp.clip(jnp.round(x_nchw * 2.0 ** in_scale), 0.0, 255.0)
    x = x.transpose(0, 2, 3, 1)                            # NCHW -> NHWC (once)

    # layer 1
    x = _conv_quant_layer(
        x, w1, b1, muls[0],
        div1=2.0 ** (17 + in_scale - clp_k),
        clp=float(clp[0]), scl=float(scl_q[0]),
        div2=2.0 ** (16 + clp_k - scl_k), is_last=False)
    # layers 2, 3
    for i, (wgt, bias) in enumerate([(w2, b2), (w3, b3)], start=1):
        x = _conv_quant_layer(
            x, wgt, bias, muls[i],
            div1=2.0 ** (23 - clp_k),
            clp=float(clp[i]), scl=float(scl_q[i]),
            div2=2.0 ** (16 + clp_k - scl_k), is_last=False)
    # layer 4 (no clip / rescale, just the final floor-divide)
    x = _conv_quant_layer(
        x, w4, b4, muls[3],
        div1=2.0 ** (15 - delta_dvd),
        clp=0.0, scl=0.0, div2=1.0, is_last=True)
    return x.transpose(0, 3, 1, 2)                         # back to NCHW (f32)


def _reference_forward(x_nchw, params, muls, relus, Bits=8):
    """Pure-JAX (XLA conv, NCHW, f32) reference of the same forward."""
    (w1, b1), (w2, b2), (w3, b3), (w4, b4) = params
    clp_k, in_scale, scl_k, delta_dvd = 7, 8, 4, 0
    clp = [round((math.pow(2.0, Bits) - 1) / relus[i] * 2 ** (16 + clp_k))
           for i in range(len(relus))]
    scl_q = [math.floor((relus[i] + 2 ** (scl_k - 1)) / 2 ** scl_k) for i in range(3)]

    def conv(a, wgt):
        return jax.lax.conv_general_dilated(
            a, jnp.round(wgt), window_strides=(STRIDE, STRIDE),
            padding=((PAD, PAD), (PAD, PAD)),
            dimension_numbers=("NCHW", "OIHW", "NCHW"),
            precision=jax.lax.Precision.HIGHEST)

    def affine(y, bias, mul):
        m = mul.reshape(1, -1, 1, 1)
        return y * m + jnp.round(bias).reshape(1, -1, 1, 1) * m

    ws = [w1, w2, w3, w4]
    bs = [b1, b2, b3, b4]
    div1s = [2.0 ** (17 + in_scale - clp_k), 2.0 ** (23 - clp_k),
             2.0 ** (23 - clp_k), 2.0 ** (15 - delta_dvd)]

    x = jnp.clip(jnp.round(x_nchw * 2.0 ** in_scale), 0.0, 255.0)
    for i in range(4):
        x = affine(conv(x, ws[i]), bs[i], muls[i])
        x = jnp.floor(x / div1s[i] + 0.5)
        if i < 3:
            x = jnp.clip(x, 0.0, float(clp[i]))
            x = jnp.floor(jnp.round(x * scl_q[i]) / 2.0 ** (16 + clp_k - scl_k) + 0.5)
    return x


if __name__ == "__main__":
    # Small synthetic config (real module: out_channel_N=192, out_channel_M=320).
    out_channel_N, out_channel_M = 8, 16
    batch, height, width = 2, 16, 16

    key = jax.random.PRNGKey(0)
    keys = jax.random.split(key, 13)

    x = jax.random.uniform(keys[0], (batch, 3, height, width), jnp.float32)

    def make_conv(k_w, k_b, cin, cout):
        # integer-valued weights/biases (quantized-network style), deterministic
        w = jax.random.randint(k_w, (cout, cin, KSIZE, KSIZE), -2, 3).astype(jnp.float32)
        b = jax.random.randint(k_b, (cout,), -2, 3).astype(jnp.float32)
        return w, b

    params = (
        make_conv(keys[1], keys[2], 3, out_channel_N),
        make_conv(keys[3], keys[4], out_channel_N, out_channel_N),
        make_conv(keys[5], keys[6], out_channel_N, out_channel_N),
        make_conv(keys[7], keys[8], out_channel_N, out_channel_M),
    )
    muls = [
        jax.random.randint(keys[9], (out_channel_N,), 2_000_000, 3_000_000).astype(jnp.float32),
        jax.random.randint(keys[10], (out_channel_N,), 200_000, 400_000).astype(jnp.float32),
        jax.random.randint(keys[11], (out_channel_N,), 200_000, 400_000).astype(jnp.float32),
        jax.random.randint(keys[12], (out_channel_M,), 1_000, 3_000).astype(jnp.float32),
    ]
    relus = [8192.0, 8192.0, 8192.0, 8192.0]

    out = jax.block_until_ready(analysis_net_forward(x, params, muls, relus, Bits=8))
    ref = jax.block_until_ready(_reference_forward(x, params, muls, relus, Bits=8))

    assert out.shape == (batch, out_channel_M, height // 16, width // 16), out.shape
    max_err = float(jnp.max(jnp.abs(out - ref)))
    assert max_err <= 1.0, f"mismatch vs reference, max_err={max_err}"
    print("KERNEL_OK")
</pallas_src>

<mosaic_0001>
module attributes {stable_mosaic.version = 11 : i64} {
  func.func @_conv_quant_kernel(%arg0: i32, %arg1: i32, %arg2: memref<1x1x6x40x3xbf16, #tpu.memory_space<vmem>>, %arg3: memref<1x75x8xbf16, #tpu.memory_space<vmem>>, %arg4: memref<1x8xf32, #tpu.memory_space<vmem>>, %arg5: memref<1x8xf32, #tpu.memory_space<vmem>>, %arg6: memref<1x4x8x8xbf16, #tpu.memory_space<vmem>>) attributes {dimension_semantics = [#tpu.dimension_semantics<parallel>, #tpu.dimension_semantics<parallel>], iteration_bounds = array<i64: 2, 2>, scalar_prefetch = 0 : i64, scratch_operands = 0 : i64, tpu.core_type = #tpu.core_type<tc>, window_params = [{transform_indices = @transform_0, window_bounds = array<i64: 1, 1, 6, 40, 3>}, {pipeline_mode = #tpu.pipeline_mode<synchronous>, transform_indices = @transform_1, window_bounds = array<i64: 1, 75, 8>}, {pipeline_mode = #tpu.pipeline_mode<synchronous>, transform_indices = @transform_2, window_bounds = array<i64: 1, 8>}, {pipeline_mode = #tpu.pipeline_mode<synchronous>, transform_indices = @transform_3, window_bounds = array<i64: 1, 8>}, {transform_indices = @transform_4, window_bounds = array<i64: 1, 4, 8, 8>}]} {
    %c0 = arith.constant 0 : index
    %c0_0 = arith.constant 0 : index
    %c0_1 = arith.constant 0 : index
    %c0_2 = arith.constant 0 : index
    %c0_3 = arith.constant 0 : index
    %0 = vector.load %arg2[%c0, %c0_0, %c0_1, %c0_2, %c0_3] : memref<1x1x6x40x3xbf16, #tpu.memory_space<vmem>>, vector<1x1x4x8x3xbf16>
    %1 = vector.shape_cast %0 : vector<1x1x4x8x3xbf16> to vector<4x8x3xbf16>
    %c0_4 = arith.constant 0 : index
    %c0_5 = arith.constant 0 : index
    %c0_6 = arith.constant 0 : index
    %c10 = arith.constant 10 : index
    %c0_7 = arith.constant 0 : index
    %2 = vector.load %arg2[%c0_4, %c0_5, %c0_6, %c10, %c0_7] : memref<1x1x6x40x3xbf16, #tpu.memory_space<vmem>>, vector<1x1x4x8x3xbf16>
    %3 = vector.shape_cast %2 : vector<1x1x4x8x3xbf16> to vector<4x8x3xbf16>
    %c0_8 = arith.constant 0 : index
    %c0_9 = arith.constant 0 : index
    %c0_10 = arith.constant 0 : index
    %c1 = arith.constant 1 : index
    %c0_11 = arith.constant 0 : index
    %4 = vector.load %arg2[%c0_8, %c0_9, %c0_10, %c1, %c0_11] : memref<1x1x6x40x3xbf16, #tpu.memory_space<vmem>>, vector<1x1x4x8x3xbf16>
    %5 = vector.shape_cast %4 : vector<1x1x4x8x3xbf16> to vector<4x8x3xbf16>
    %c0_12 = arith.constant 0 : index
    %c0_13 = arith.constant 0 : index
    %c0_14 = arith.constant 0 : index
    %c11 = arith.constant 11 : index
    %c0_15 = arith.constant 0 : index
    %6 = vector.load %arg2[%c0_12, %c0_13, %c0_14, %c11, %c0_15] : memref<1x1x6x40x3xbf16, #tpu.memory_space<vmem>>, vector<1x1x4x8x3xbf16>
    %7 = vector.shape_cast %6 : vector<1x1x4x8x3xbf16> to vector<4x8x3xbf16>
    %c0_16 = arith.constant 0 : index
    %c0_17 = arith.constant 0 : index
    %c0_18 = arith.constant 0 : index
    %c2 = arith.constant 2 : index
    %c0_19 = arith.constant 0 : index
    %8 = vector.load %arg2[%c0_16, %c0_17, %c0_18, %c2, %c0_19] : memref<1x1x6x40x3xbf16, #tpu.memory_space<vmem>>, vector<1x1x4x8x3xbf16>
    %9 = vector.shape_cast %8 : vector<1x1x4x8x3xbf16> to vector<4x8x3xbf16>
    %c0_20 = arith.constant 0 : index
    %c0_21 = arith.constant 0 : index
    %c0_22 = arith.constant 0 : index
    %c20 = arith.constant 20 : index
    %c0_23 = arith.constant 0 : index
    %10 = vector.load %arg2[%c0_20, %c0_21, %c0_22, %c20, %c0_23] : memref<1x1x6x40x3xbf16, #tpu.memory_space<vmem>>, vector<1x1x4x8x3xbf16>
    %11 = vector.shape_cast %10 : vector<1x1x4x8x3xbf16> to vector<4x8x3xbf16>
    %c0_24 = arith.constant 0 : index
    %c0_25 = arith.constant 0 : index
    %c0_26 = arith.constant 0 : index
    %c30 = arith.constant 30 : index
    %c0_27 = arith.constant 0 : index
    %12 = vector.load %arg2[%c0_24, %c0_25, %c0_26, %c30, %c0_27] : memref<1x1x6x40x3xbf16, #tpu.memory_space<vmem>>, vector<1x1x4x8x3xbf16>
    %13 = vector.shape_cast %12 : vector<1x1x4x8x3xbf16> to vector<4x8x3xbf16>
    %c0_28 = arith.constant 0 : index
    %c0_29 = arith.constant 0 : index
    %c0_30 = arith.constant 0 : index
    %c21 = arith.constant 21 : index
    %c0_31 = arith.constant 0 : index
    %14 = vector.load %arg2[%c0_28, %c0_29, %c0_30, %c21, %c0_31] : memref<1x1x6x40x3xbf16, #tpu.memory_space<vmem>>, vector<1x1x4x8x3xbf16>
    %15 = vector.shape_cast %14 : vector<1x1x4x8x3xbf16> to vector<4x8x3xbf16>
    %c0_32 = arith.constant 0 : index
    %c0_33 = arith.constant 0 : index
    %c0_34 = arith.constant 0 : index
    %c31 = arith.constant 31 : index
    %c0_35 = arith.constant 0 : index
    %16 = vector.load %arg2[%c0_32, %c0_33, %c0_34, %c31, %c0_35] : memref<1x1x6x40x3xbf16, #tpu.memory_space<vmem>>, vector<1x1x4x8x3xbf16>
    %17 = vector.shape_cast %16 : vector<1x1x4x8x3xbf16> to vector<4x8x3xbf16>
    %c0_36 = arith.constant 0 : index
    %c0_37 = arith.constant 0 : index
    %c0_38 = arith.constant 0 : index
    %c22 = arith.constant 22 : index
    %c0_39 = arith.constant 0 : index
    %18 = vector.load %arg2[%c0_36, %c0_37, %c0_38, %c22, %c0_39] : memref<1x1x6x40x3xbf16, #tpu.memory_space<vmem>>, vector<1x1x4x8x3xbf16>
    %19 = vector.shape_cast %18 : vector<1x1x4x8x3xbf16> to vector<4x8x3xbf16>
    %c0_40 = arith.constant 0 : index
    %c0_41 = arith.constant 0 : index
    %c1_42 = arith.constant 1 : index
    %c0_43 = arith.constant 0 : index
    %c0_44 = arith.constant 0 : index
    %20 = vector.load %arg2[%c0_40, %c0_41, %c1_42, %c0_43, %c0_44] : memref<1x1x6x40x3xbf16, #tpu.memory_space<vmem>>, vector<1x1x4x8x3xbf16>
    %21 = vector.shape_cast %20 : vector<1x1x4x8x3xbf16> to vector<4x8x3xbf16>
    %c0_45 = arith.constant 0 : index
    %c0_46 = arith.constant 0 : index
    %c1_47 = arith.constant 1 : index
    %c10_48 = arith.constant 10 : index
    %c0_49 = arith.constant 0 : index
    %22 = vector.load %arg2[%c0_45, %c0_46, %c1_47, %c10_48, %c0_49] : memref<1x1x6x40x3xbf16, #tpu.memory_space<vmem>>, vector<1x1x4x8x3xbf16>
    %23 = vector.shape_cast %22 : vector<1x1x4x8x3xbf16> to vector<4x8x3xbf16>
    %c0_50 = arith.constant 0 : index
    %c0_51 = arith.constant 0 : index
    %c1_52 = arith.constant 1 : index
    %c1_53 = arith.constant 1 : index
    %c0_54 = arith.constant 0 : index
    %24 = vector.load %arg2[%c0_50, %c0_51, %c1_52, %c1_53, %c0_54] : memref<1x1x6x40x3xbf16, #tpu.memory_space<vmem>>, vector<1x1x4x8x3xbf16>
    %25 = vector.shape_cast %24 : vector<1x1x4x8x3xbf16> to vector<4x8x3xbf16>
    %c0_55 = arith.constant 0 : index
    %c0_56 = arith.constant 0 : index
    %c1_57 = arith.constant 1 : index
    %c11_58 = arith.constant 11 : index
    %c0_59 = arith.constant 0 : index
    %26 = vector.load %arg2[%c0_55, %c0_56, %c1_57, %c11_58, %c0_59] : memref<1x1x6x40x3xbf16, #tpu.memory_space<vmem>>, vector<1x1x4x8x3xbf16>
    %27 = vector.shape_cast %26 : vector<1x1x4x8x3xbf16> to vector<4x8x3xbf16>
    %c0_60 = arith.constant 0 : index
    %c0_61 = arith.constant 0 : index
    %c1_62 = arith.constant 1 : index
    %c2_63 = arith.constant 2 : index
    %c0_64 = arith.constant 0 : index
    %28 = vector.load %arg2[%c0_60, %c0_61, %c1_62, %c2_63, %c0_64] : memref<1x1x6x40x3xbf16, #tpu.memory_space<vmem>>, vector<1x1x4x8x3xbf16>
    %29 = vector.shape_cast %28 : vector<1x1x4x8x3xbf16> to vector<4x8x3xbf16>
    %c0_65 = arith.constant 0 : index
    %c0_66 = arith.constant 0 : index
    %c1_67 = arith.constant 1 : index
    %c20_68 = arith.constant 20 : index
    %c0_69 = arith.constant 0 : index
    %30 = vector.load %arg2[%c0_65, %c0_66, %c1_67, %c20_68, %c0_69] : memref<1x1x6x40x3xbf16, #tpu.memory_space<vmem>>, vector<1x1x4x8x3xbf16>
    %31 = vector.shape_cast %30 : vector<1x1x4x8x3xbf16> to vector<4x8x3xbf16>
    %c0_70 = arith.constant 0 : index
    %c0_71 = arith.constant 0 : index
    %c1_72 = arith.constant 1 : index
    %c30_73 = arith.constant 30 : index
    %c0_74 = arith.constant 0 : index
    %32 = vector.load %arg2[%c0_70, %c0_71, %c1_72, %c30_73, %c0_74] : memref<1x1x6x40x3xbf16, #tpu.memory_space<vmem>>, vector<1x1x4x8x3xbf16>
    %33 = vector.shape_cast %32 : vector<1x1x4x8x3xbf16> to vector<4x8x3xbf16>
    %c0_75 = arith.constant 0 : index
    %c0_76 = arith.constant 0 : index
    %c1_77 = arith.constant 1 : index
    %c21_78 = arith.constant 21 : index
    %c0_79 = arith.constant 0 : index
    %34 = vector.load %arg2[%c0_75, %c0_76, %c1_77, %c21_78, %c0_79] : memref<1x1x6x40x3xbf16, #tpu.memory_space<vmem>>, vector<1x1x4x8x3xbf16>
    %35 = vector.shape_cast %34 : vector<1x1x4x8x3xbf16> to vector<4x8x3xbf16>
    %c0_80 = arith.constant 0 : index
    %c0_81 = arith.constant 0 : index
    %c1_82 = arith.constant 1 : index
    %c31_83 = arith.constant 31 : index
    %c0_84 = arith.constant 0 : index
    %36 = vector.load %arg2[%c0_80, %c0_81, %c1_82, %c31_83, %c0_84] : memref<1x1x6x40x3xbf16, #tpu.memory_space<vmem>>, vector<1x1x4x8x3xbf16>
    %37 = vector.shape_cast %36 : vector<1x1x4x8x3xbf16> to vector<4x8x3xbf16>
    %c0_85 = arith.constant 0 : index
    %c0_86 = arith.constant 0 : index
    %c1_87 = arith.constant 1 : index
    %c22_88 = arith.constant 22 : index
    %c0_89 = arith.constant 0 : index
    %38 = vector.load %arg2[%c0_85, %c0_86, %c1_87, %c22_88, %c0_89] : memref<1x1x6x40x3xbf16, #tpu.memory_space<vmem>>, vector<1x1x4x8x3xbf16>
    %39 = vector.shape_cast %38 : vector<1x1x4x8x3xbf16> to vector<4x8x3xbf16>
    %c0_90 = arith.constant 0 : index
    %c0_91 = arith.constant 0 : index
    %c2_92 = arith.constant 2 : index
    %c0_93 = arith.constant 0 : index
    %c0_94 = arith.constant 0 : index
    %40 = vector.load %arg2[%c0_90, %c0_91, %c2_92, %c0_93, %c0_94] : memref<1x1x6x40x3xbf16, #tpu.memory_space<vmem>>, vector<1x1x4x8x3xbf16>
    %41 = vector.shape_cast %40 : vector<1x1x4x8x3xbf16> to vector<4x8x3xbf16>
    %c0_95 = arith.constant 0 : index
    %c0_96 = arith.constant 0 : index
    %c2_97 = arith.constant 2 : index
    %c10_98 = arith.constant 10 : index
    %c0_99 = arith.constant 0 : index
    %42 = vector.load %arg2[%c0_95, %c0_96, %c2_97, %c10_98, %c0_99] : memref<1x1x6x40x3xbf16, #tpu.memory_space<vmem>>, vector<1x1x4x8x3xbf16>
    %43 = vector.shape_cast %42 : vector<1x1x4x8x3xbf16> to vector<4x8x3xbf16>
    %c0_100 = arith.constant 0 : index
    %c0_101 = arith.constant 0 : index
    %c2_102 = arith.constant 2 : index
    %c1_103 = arith.constant 1 : index
    %c0_104 = arith.constant 0 : index
    %44 = vector.load %arg2[%c0_100, %c0_101, %c2_102, %c1_103, %c0_104] : memref<1x1x6x40x3xbf16, #tpu.memory_space<vmem>>, vector<1x1x4x8x3xbf16>
    %45 = vector.shape_cast %44 : vector<1x1x4x8x3xbf16> to vector<4x8x3xbf16>
    %c0_105 = arith.constant 0 : index
    %c0_106 = arith.constant 0 : index
    %c2_107 = arith.constant 2 : index
    %c11_108 = arith.constant 11 : index
    %c0_109 = arith.constant 0 : index
    %46 = vector.load %arg2[%c0_105, %c0_106, %c2_107, %c11_108, %c0_109] : memref<1x1x6x40x3xbf16, #tpu.memory_space<vmem>>, vector<1x1x4x8x3xbf16>
    %47 = vector.shape_cast %46 : vector<1x1x4x8x3xbf16> to vector<4x8x3xbf16>
    %c0_110 = arith.constant 0 : index
    %c0_111 = arith.constant 0 : index
    %c2_112 = arith.constant 2 : index
    %c2_113 = arith.constant 2 : index
    %c0_114 = arith.constant 0 : index
    %48 = vector.load %arg2[%c0_110, %c0_111, %c2_112, %c2_113, %c0_114] : memref<1x1x6x40x3xbf16, #tpu.memory_space<vmem>>, vector<1x1x4x8x3xbf16>
    %49 = vector.shape_cast %48 : vector<1x1x4x8x3xbf16> to vector<4x8x3xbf16>
    %50 = tpu.concatenate %1, %3, %5, %7, %9, %11, %13, %15, %17, %19, %21, %23, %25, %27, %29, %31 in 2 : vector<4x8x3xbf16>, vector<4x8x3xbf16>, vector<4x8x3xbf16>, vector<4x8x3xbf16>, vector<4x8x3xbf16>, vector<4x8x3xbf16>, vector<4x8x3xbf16>, vector<4x8x3xbf16>, vector<4x8x3xbf16>, vector<4x8x3xbf16>, vector<4x8x3xbf16>, vector<4x8x3xbf16>, vector<4x8x3xbf16>, vector<4x8x3xbf16>, vector<4x8x3xbf16>, vector<4x8x3xbf16> -> vector<4x8x48xbf16>
    %51 = tpu.concatenate %33, %35, %37, %39, %41, %43, %45, %47, %49 in 2 : vector<4x8x3xbf16>, vector<4x8x3xbf16>, vector<4x8x3xbf16>, vector<4x8x3xbf16>, vector<4x8x3xbf16>, vector<4x8x3xbf16>, vector<4x8x3xbf16>, vector<4x8x3xbf16>, vector<4x8x3xbf16> -> vector<4x8x27xbf16>
    %52 = tpu.concatenate %50, %51 in 2 : vector<4x8x48xbf16>, vector<4x8x27xbf16> -> vector<4x8x75xbf16>
    %53 = vector.shape_cast %52 : vector<4x8x75xbf16> to vector<32x75xbf16>
    %c0_115 = arith.constant 0 : index
    %c0_116 = arith.constant 0 : index
    %c0_117 = arith.constant 0 : index
    %54 = vector.load %arg3[%c0_115, %c0_116, %c0_117] : memref<1x75x8xbf16, #tpu.memory_space<vmem>>, vector<1x75x8xbf16>
    %55 = vector.shape_cast %54 : vector<1x75x8xbf16> to vector<75x8xbf16>
    %cst = arith.constant dense<0.000000e+00> : vector<32x8xf32>
    %56 = tpu.matmul %53, %55, %cst {dimension_numbers = #tpu.dot_dimension_numbers<[1], [0], [0], [1], [0, 0, 1, 1], [], []>} : vector<32x75xbf16>, vector<75x8xbf16>, vector<32x8xf32> -> vector<32x8xf32>
    %c0_118 = arith.constant 0 : index
    %c0_119 = arith.constant 0 : index
    %57 = vector.load %arg4[%c0_118, %c0_119] : memref<1x8xf32, #tpu.memory_space<vmem>>, vector<1x8xf32>
    %58 = vector.broadcast %57 : vector<1x8xf32> to vector<32x8xf32>
    %59 = arith.mulf %56, %58 : vector<32x8xf32>
    %c0_120 = arith.constant 0 : index
    %c0_121 = arith.constant 0 : index
    %60 = vector.load %arg5[%c0_120, %c0_121] : memref<1x8xf32, #tpu.memory_space<vmem>>, vector<1x8xf32>
    %61 = vector.broadcast %60 : vector<1x8xf32> to vector<32x8xf32>
    %62 = arith.addf %59, %61 : vector<32x8xf32>
    %cst_122 = arith.constant 3.81469727E-6 : f32
    %63 = vector.broadcast %cst_122 : f32 to vector<32x8xf32>
    %64 = arith.mulf %62, %63 : vector<32x8xf32>
    %cst_123 = arith.constant 5.000000e-01 : f32
    %65 = vector.broadcast %cst_123 : f32 to vector<32x8xf32>
    %66 = arith.addf %64, %65 : vector<32x8xf32>
    %67 = math.floor %66 : vector<32x8xf32>
    %cst_124 = arith.constant 0.000000e+00 : f32
    %cst_125 = arith.constant 2.611200e+05 : f32
    %68 = vector.broadcast %cst_124 : f32 to vector<32x8xf32>
    %69 = arith.maximumf %68, %67 : vector<32x8xf32>
    %70 = vector.broadcast %cst_125 : f32 to vector<32x8xf32>
    %71 = arith.minimumf %70, %69 : vector<32x8xf32>
    %cst_126 = arith.constant 5.120000e+02 : f32
    %72 = vector.broadcast %cst_126 : f32 to vector<32x8xf32>
    %73 = arith.mulf %71, %72 : vector<32x8xf32>
    %74 = math.roundeven %73 : vector<32x8xf32>
    %cst_127 = arith.constant 1.90734863E-6 : f32
    %75 = vector.broadcast %cst_127 : f32 to vector<32x8xf32>
    %76 = arith.mulf %74, %75 : vector<32x8xf32>
    %cst_128 = arith.constant 5.000000e-01 : f32
    %77 = vector.broadcast %cst_128 : f32 to vector<32x8xf32>
    %78 = arith.addf %76, %77 : vector<32x8xf32>
    %79 = math.floor %78 : vector<32x8xf32>
    %80 = vector.shape_cast %79 : vector<32x8xf32> to vector<1x4x8x8xf32>
    %81 = arith.truncf %80 : vector<1x4x8x8xf32> to vector<1x4x8x8xbf16>
    %c0_129 = arith.constant 0 : index
    %c0_130 = arith.constant 0 : index
    %c0_131 = arith.constant 0 : index
    %c0_132 = arith.constant 0 : index
    %82 = vector.load %arg6[%c0_129, %c0_130, %c0_131, %c0_132] : memref<1x4x8x8xbf16, #tpu.memory_space<vmem>>, vector<1x4x8x8xbf16>
    tpu.vector_store %arg6[%c0_129, %c0_130, %c0_131, %c0_132], %81 {strides = array<i32>} : memref<1x4x8x8xbf16, #tpu.memory_space<vmem>>, vector<1x4x8x8xbf16>,
    return
  }
  func.func @transform_0(%arg0: i32, %arg1: i32) -> (i32, i32, i32, i32, i32) {
    %c0_i32 = arith.constant 0 : i32
    %c0_i32_0 = arith.constant 0 : i32
    %c0_i32_1 = arith.constant 0 : i32
    %c0_i32_2 = arith.constant 0 : i32
    return %arg0, %arg1, %c0_i32, %c0_i32_0, %c0_i32_1 : i32, i32, i32, i32, i32
  }
  func.func @transform_1(%arg0: i32, %arg1: i32) -> (i32, i32, i32) {
    %c0_i32 = arith.constant 0 : i32
    %c0_i32_0 = arith.constant 0 : i32
    %c0_i32_1 = arith.constant 0 : i32
    %c0_i32_2 = arith.constant 0 : i32
    return %c0_i32, %c0_i32_0, %c0_i32_1 : i32, i32, i32
  }
  func.func @transform_2(%arg0: i32, %arg1: i32) -> (i32, i32) {
    %c0_i32 = arith.constant 0 : i32
    %c0_i32_0 = arith.constant 0 : i32
    %c0_i32_1 = arith.constant 0 : i32
    return %c0_i32, %c0_i32_0 : i32, i32
  }
  func.func @transform_3(%arg0: i32, %arg1: i32) -> (i32, i32) {
    %c0_i32 = arith.constant 0 : i32
    %c0_i32_0 = arith.constant 0 : i32
    %c0_i32_1 = arith.constant 0 : i32
    return %c0_i32, %c0_i32_0 : i32, i32
  }
  func.func @transform_4(%arg0: i32, %arg1: i32) -> (i32, i32, i32, i32) {
    %c0_i32 = arith.constant 0 : i32
    %c0_i32_0 = arith.constant 0 : i32
    %c0_i32_1 = arith.constant 0 : i32
    return %arg0, %arg1, %c0_i32, %c0_i32_0 : i32, i32, i32, i32
  }
}

</mosaic_0001>

<llo_original>
// kernel: tpu_custom_call.1
$region0: #{tpu_custom_call.1}
  #allocation0 [shape = 'u32[]', space=smem, size = 0x4, offset = 0x4, fixed_abs, tag = 'smem constant byte address 0x4 - core index']
  #allocation1 [shape = 'u32[72,128]{1,0:T(1,128)}', space=vmem, size = 0x9000, scoped, tag = 'internal scratch']
  %s0 = inlined_call_operand.vmem [shape: bf16[2,2,6,40,3], index: 0, kind: input, shape index: {}]
  %s1 = inlined_call_operand.vmem [shape: bf16[1,75,8], index: 1, kind: input, shape index: {}]
  %s2 = inlined_call_operand.vmem [shape: f32[1,8], index: 2, kind: input, shape index: {}]
  %s3 = inlined_call_operand.vmem [shape: f32[1,8], index: 3, kind: input, shape index: {}]
  %s4 = inlined_call_operand.hbm [shape: bf16[2,8,8,8], index: 4, kind: output, shape index: {}]
  %s5 = sld [smem:[#allocation0]]
  $region49: #{tpu_custom_call.1} parent=0
    _
  %s7 = ssub.s32 1, %s5
  %s8 = scalar_select 0, %s7, %s5
  $region1: #{tpu_custom_call.1} parent=0
    #allocation2 [shape = 'u8[16384]{0}', space=vmem, size = 0x4000, scoped, tag = 'output window, operand 0']
    #allocation3 [shape = 's32[2]{0}', space=sflag, size = 0x8, scoped, tag = 'scoped memory for tpu_custom_call.1']
    %9 = vsyncpa [#allocation3], 0
    %s10 = scalar_lea.sflag [#allocation3], 1
    %11 = vsyncpa %s10, 0
    loop: start=0, step=1, limit=6
    $region2: #{tpu_custom_call.1} parent=1 // loop_pre_header
      _
    $region3: #{tpu_custom_call.1} parent=1 // loop_header
      %s13 = sphi 0, %s17
      %p14 = scmp.ge.s32.totalorder %s13, 6
      %s20 = sphi 0, %s32
      %s21 = sphi 0, %s28
      %s22 = sphi 0, %s20
      %s23 = sphi 0, %s21
      %s24 = sphi 0, %s22
      %s25 = sphi 0, %s23
      %s37 = sphi 0, %s39
      %s40 = sphi 0, %s37
      %s41 = sphi 0, %s40
      %s57 = sphi 0, %s41
      %s61 = sphi 0, %s61
      %s63 = sphi 0, %s61
      %s64 = sphi 0, %s63
      %s78 = sphi 0, %s64
      %s82 = sphi 0, %s82
      %s84 = sphi 0, %s82
      %s85 = sphi 0, %s84
      %s99 = sphi 0, %s85
      %s103 = sphi 0, %s103
      %s105 = sphi 0, %s103
      %s106 = sphi 0, %s105
      %s120 = sphi 0, %s106
      %s128 = sphi 0, %s130
      %s131 = sphi 0, %s128
      %s132 = sphi 0, %s131
      %s148 = sphi 0, %s132
    $region4: #{tpu_custom_call.1} parent=1 // loop_header_branch
      %16 = sbr.rel (%p14) target = $region8
    $region5: #{tpu_custom_call.1} parent=1 // loop_body
      %s18 = ssub.s32 %s13, 1
      %s19 = ssub.s32 %s13, 2
      %s26 = sadd.s32 1, %s21
      %p27 = scmp.ge.s32.totalorder %s26, 2
      %s28 = scalar_select %p27, 0, %s26
      %s29 = sadd.s32 1, %s20
      %s30 = scalar_select %p27, %s29, %s20
      %p31 = scmp.ge.s32.totalorder %s30, 2
      %s32 = scalar_select %p31, 0, %s30
      %s33 = ssub.s32 %s20, %s32
      %s34 = ssub.s32 %s21, %s28
      %s35 = sor.u32 %s33, %s34
      %p36 = scmp.eq.s32.totalorder %s35, 0
      %s38 = sadd.s32 %s37, 1
      %s39 = scalar_select %p36, %s37, %s38
      %p42 = pneg %p36
      %p43 = scmp.eq.s32.totalorder %s13, 3
      %p44 = por %p42, %p43
      %p45 = scmp.ne.s32.totalorder %s37, %s40
      %p46 = scmp.eq.s32.totalorder %s13, 0
      %p47 = por %p45, %p46
      %p48 = scmp.ne.s32.totalorder %s37, %s40
      %p49 = scmp.eq.s32.totalorder %s18, 3
      %p50 = por %p48, %p49
      %p51 = scmp.ne.s32.totalorder %s40, %s41
      %p52 = scmp.eq.s32.totalorder %s18, 0
      %p53 = por %p51, %p52
      %p54 = scmp.ne.s32.totalorder %s40, %s41
      %p55 = scmp.eq.s32.totalorder %s19, 3
      %p56 = por %p54, %p55
      %p58 = scmp.ne.s32.totalorder %s41, %s57
      %p59 = scmp.eq.s32.totalorder %s19, 0
      %p60 = por %p58, %p59
      %s62 = sadd.s32 %s61, 1
      %p65 = scmp.eq.s32.totalorder %s13, 3
      %p66 = scmp.ne.s32.totalorder %s61, %s63
      %p67 = scmp.eq.s32.totalorder %s13, 0
      %p68 = por %p66, %p67
      %p69 = scmp.ne.s32.totalorder %s61, %s63
      %p70 = scmp.eq.s32.totalorder %s18, 3
      %p71 = por %p69, %p70
      %p72 = scmp.ne.s32.totalorder %s63, %s64
      %p73 = scmp.eq.s32.totalorder %s18, 0
      %p74 = por %p72, %p73
      %p75 = scmp.ne.s32.totalorder %s63, %s64
      %p76 = scmp.eq.s32.totalorder %s19, 3
      %p77 = por %p75, %p76
      %p79 = scmp.ne.s32.totalorder %s64, %s78
      %p80 = scmp.eq.s32.totalorder %s19, 0
      %p81 = por %p79, %p80
      %s83 = sadd.s32 %s82, 1
      %p86 = scmp.eq.s32.totalorder %s13, 3
      %p87 = scmp.ne.s32.totalorder %s82, %s84
      %p88 = scmp.eq.s32.totalorder %s13, 0
      %p89 = por %p87, %p88
      %p90 = scmp.ne.s32.totalorder %s82, %s84
      %p91 = scmp.eq.s32.totalorder %s18, 3
      %p92 = por %p90, %p91
      %p93 = scmp.ne.s32.totalorder %s84, %s85
      %p94 = scmp.eq.s32.totalorder %s18, 0
      %p95 = por %p93, %p94
      %p96 = scmp.ne.s32.totalorder %s84, %s85
      %p97 = scmp.eq.s32.totalorder %s19, 3
      %p98 = por %p96, %p97
      %p100 = scmp.ne.s32.totalorder %s85, %s99
      %p101 = scmp.eq.s32.totalorder %s19, 0
      %p102 = por %p100, %p101
      %s104 = sadd.s32 %s103, 1
      %p107 = scmp.eq.s32.totalorder %s13, 3
      %p108 = scmp.ne.s32.totalorder %s103, %s105
      %p109 = scmp.eq.s32.totalorder %s13, 0
      %p110 = por %p108, %p109
      %p111 = scmp.ne.s32.totalorder %s103, %s105
      %p112 = scmp.eq.s32.totalorder %s18, 3
      %p113 = por %p111, %p112
      %p114 = scmp.ne.s32.totalorder %s105, %s106
      %p115 = scmp.eq.s32.totalorder %s18, 0
      %p116 = por %p114, %p115
      %p117 = scmp.ne.s32.totalorder %s105, %s106
      %p118 = scmp.eq.s32.totalorder %s19, 3
      %p119 = por %p117, %p118
      %p121 = scmp.ne.s32.totalorder %s106, %s120
      %p122 = scmp.eq.s32.totalorder %s19, 0
      %p123 = por %p121, %p122
      %s124 = ssub.s32 %s20, %s32
      %s125 = ssub.s32 %s21, %s28
      %s126 = sor.u32 %s124, %s125
      %p127 = scmp.eq.s32.totalorder %s126, 0
      %s129 = sadd.s32 %s128, 1
      %s130 = scalar_select %p127, %s128, %s129
      %p133 = pneg %p127
      %p134 = scmp.eq.s32.totalorder %s13, 3
      %p135 = por %p133, %p134
      %p136 = scmp.ne.s32.totalorder %s128, %s131
      %p137 = scmp.eq.s32.totalorder %s13, 0
      %p138 = por %p136, %p137
      %p139 = scmp.ne.s32.totalorder %s128, %s131
      %p140 = scmp.eq.s32.totalorder %s18, 3
      %p141 = por %p139, %p140
      %p142 = scmp.ne.s32.totalorder %s131, %s132
      %p143 = scmp.eq.s32.totalorder %s18, 0
      %p144 = por %p142, %p143
      %p145 = scmp.ne.s32.totalorder %s131, %s132
      %p146 = scmp.eq.s32.totalorder %s19, 3
      %p147 = por %p145, %p146
      %p149 = scmp.ne.s32.totalorder %s132, %s148
      %p150 = scmp.eq.s32.totalorder %s19, 0
      %p151 = por %p149, %p150
      %p152 = scmp.le.s32.totalorder 1, %s13
      %p153 = scmp.lt.s32.totalorder %s13, 5
      %p154 = pnand %p152, %p153
      %p155 = pneg %p154
      // Predicated region
      $region9: #{tpu_custom_call.1} parent=5 // pred_check
        _
      $region10: #{tpu_custom_call.1} parent=5 // pred_check_branch
        %157 = sbr.rel (%p154) target = $region12
      $region11: #{tpu_custom_call.1} parent=5 // pred_region
        %s158 = ssub.s32 %s13, 1
        // Predicated region
        $region13: #{tpu_custom_call.1} parent=11 // pred_check
          %p159 = pneg %p74
        $region14: #{tpu_custom_call.1} parent=11 // pred_check_branch
          %161 = sbr.rel (%p159) target = $region16
        $region15: #{tpu_custom_call.1} parent=11 // pred_region
          _
        $region16: #{tpu_custom_call.1} parent=11 // pred_fallthru
          _
        // Predicated region
        $region17: #{tpu_custom_call.1} parent=11 // pred_check
          %p162 = pneg %p95
        $region18: #{tpu_custom_call.1} parent=11 // pred_check_branch
          %164 = sbr.rel (%p162) target = $region20
        $region19: #{tpu_custom_call.1} parent=11 // pred_region
          _
        $region20: #{tpu_custom_call.1} parent=11 // pred_fallthru
          _
        // Predicated region
        $region21: #{tpu_custom_call.1} parent=11 // pred_check
          %p165 = pneg %p116
        $region22: #{tpu_custom_call.1} parent=11 // pred_check_branch
          %167 = sbr.rel (%p165) target = $region24
        $region23: #{tpu_custom_call.1} parent=11 // pred_region
          _
        $region24: #{tpu_custom_call.1} parent=11 // pred_fallthru
          _
      $region12: #{tpu_custom_call.1} parent=5 // pred_fallthru
        _
      %p168 = scmp.lt.s32.totalorder %s13, 4
      // Predicated region
      $region25: #{tpu_custom_call.1} parent=5 // pred_check
        %p169 = pneg %p168
      $region26: #{tpu_custom_call.1} parent=5 // pred_check_branch
        %171 = sbr.rel (%p169) target = $region28
      $region27: #{tpu_custom_call.1} parent=5 // pred_region
        // Predicated region
        $region29: #{tpu_custom_call.1} parent=27 // pred_check
          %p172 = pneg %p47
        $region30: #{tpu_custom_call.1} parent=27 // pred_check_branch
          %174 = sbr.rel (%p172) target = $region32
        $region31: #{tpu_custom_call.1} parent=27 // pred_region
          %p175 = scmp.lt.s32.totalorder %s20, 1
          %s176 = scalar_select %p175, %s20, 1
          %p177 = scmp.lt.s32.totalorder %s21, 1
          %s178 = scalar_select %p177, %s21, 1
          %s179 = smul.addr %s178, 30
          %s180 = smul.addr %s176, 60
          %s181 = sadd.s32 %s179, %s180
          %s182 = smul.addr %s181, 4
          %s183 = scalar_lea.vmem %s0, %s182
        $region32: #{tpu_custom_call.1} parent=27 // pred_fallthru
          _
      $region28: #{tpu_custom_call.1} parent=5 // pred_fallthru
        _
      %p184 = scmp.le.s32.totalorder 1, %s13
      %p185 = scmp.lt.s32.totalorder %s13, 5
      %p186 = pnand %p184, %p185
      %p187 = pneg %p186
      // Predicated region
      $region33: #{tpu_custom_call.1} parent=5 // pred_check
        _
      $region34: #{tpu_custom_call.1} parent=5 // pred_check_branch
        %189 = sbr.rel (%p186) target = $region36
      $region35: #{tpu_custom_call.1} parent=5 // pred_region
        %s190 = ssub.s32 %s13, 1
        %p191 = scmp.lt.s32.totalorder %s22, 1
        %s192 = scalar_select %p191, %s22, 1
        %p193 = scmp.lt.s32.totalorder %s23, 1
        %s194 = scalar_select %p193, %s23, 1
        %s195 = smul.addr %s194, 30
        %s196 = smul.addr %s192, 60
        %s197 = sadd.s32 %s195, %s196
        %s198 = smul.addr %s197, 4
        %s199 = scalar_lea.vmem %s0, %s198
        %p200 = pneg %p53
        %p201 = pneg %p50
        %p202 = pneg %p74
        %p203 = pneg %p71
        %p204 = pneg %p95
        %p205 = pneg %p92
        %p206 = pneg %p116
        %p207 = pneg %p113
        %p208 = pneg %p144
        %p209 = pneg %p141
        %s210 = sand.u32 %s131, 1
        %s211 = scalar_lea.sflag [#allocation3], %s210
        %s212 = sand.u32 %s131, 1
        %s213 = smul.addr %s212, 16
        %s214 = scalar_lea.vmem [#allocation2], %s213
        %p215 = scmp.lt.s32.totalorder %s22, 1
        %s216 = scalar_select %p215, %s22, 1
        %p217 = scmp.lt.s32.totalorder %s23, 1
        %s218 = scalar_select %p217, %s23, 1
        %s219 = smul.addr %s218, 30
        %s220 = smul.addr %s216, 60
        %s221 = sadd.s32 %s219, %s220
        %s222 = smul.addr %s221, 4
        %s223 = scalar_lea.vmem %s0, %s222
        %s224 = smul.u32 4, %s23
        %v226 = vld [vmem:[%s223] sm:$0xf]
        %v227 = vld [vmem:[%s223 + $0x14] sm:$0xf]
        %v228 = vld [vmem:[%s223 + $0x28] sm:$0xf]
        %v229 = vld [vmem:[%s223 + $0x3c] sm:$0xf]
        %v230 = vld [vmem:[%s223 + $0x4] sm:$0xe]
        %v231 = vld [vmem:[%s223 + $0x8] sm:$0x1]
        %v232 = vld [vmem:[%s223 + $0x18] sm:$0xe]
        %v233 = vld [vmem:[%s223 + $0x1c] sm:$0x1]
        %v234 = vld [vmem:[%s223 + $0x2c] sm:$0xe]
        %v235 = vld [vmem:[%s223 + $0x30] sm:$0x1]
        %v236 = vld [vmem:[%s223 + $0x40] sm:$0xe]
        %v237 = vld [vmem:[%s223 + $0x44] sm:$0x1]
        %v238 = vld [vmem:[%s223 + $0x4] sm:$0x1]
        %v239 = vld [vmem:[%s223 + $0x18] sm:$0x1]
        %v240 = vld [vmem:[%s223 + $0x2c] sm:$0x1]
        %v241 = vld [vmem:[%s223 + $0x40] sm:$0x1]
        %v242 = vld [vmem:[%s223 + $0x8] sm:$0x3]
        %v243 = vld [vmem:[%s223 + $0x1c] sm:$0x3]
        %v244 = vld [vmem:[%s223 + $0x30] sm:$0x3]
        %v245 = vld [vmem:[%s223 + $0x44] sm:$0x3]
        %v246 = vld [vmem:[%s223] sm:$0xe]
        %v247 = vld [vmem:[%s223 + $0x14] sm:$0xe]
        %v248 = vld [vmem:[%s223 + $0x28] sm:$0xe]
        %v249 = vld [vmem:[%s223 + $0x3c] sm:$0xe]
        %v250 = vld [vmem:[%s223 + $0x8] sm:$0xc]
        %v251 = vld [vmem:[%s223 + $0xc] sm:$0x3]
        %v252 = vld [vmem:[%s223 + $0x1c] sm:$0xc]
        %v253 = vld [vmem:[%s223 + $0x20] sm:$0x3]
        %v254 = vld [vmem:[%s223 + $0x30] sm:$0xc]
        %v255 = vld [vmem:[%s223 + $0x34] sm:$0x3]
        %v256 = vld [vmem:[%s223 + $0x44] sm:$0xc]
        %v257 = vld [vmem:[%s223 + $0x48] sm:$0x3]
        %v258 = vld [vmem:[%s223 + $0xc] sm:$0x8]
        %v259 = vld [vmem:[%s223 + $0x10] sm:$0x7]
        %v260 = vld [vmem:[%s223 + $0x20] sm:$0x8]
        %v261 = vld [vmem:[%s223 + $0x24] sm:$0x7]
        %v262 = vld [vmem:[%s223 + $0x34] sm:$0x8]
        %v263 = vld [vmem:[%s223 + $0x38] sm:$0x7]
        %v264 = vld [vmem:[%s223 + $0x48] sm:$0x8]
        %v265 = vld [vmem:[%s223 + $0x4c] sm:$0x7]
        %v266 = vld [vmem:[%s223 + $0xc] sm:$0x7]
        %v267 = vld [vmem:[%s223 + $0x20] sm:$0x7]
        %v268 = vld [vmem:[%s223 + $0x34] sm:$0x7]
        %v269 = vld [vmem:[%s223 + $0x48] sm:$0x7]
        %v270 = vld [vmem:[%s223 + $0x10] sm:$0xf]
        %v271 = vld [vmem:[%s223 + $0x24] sm:$0xf]
        %v272 = vld [vmem:[%s223 + $0x38] sm:$0xf]
        %v273 = vld [vmem:[%s223 + $0x4c] sm:$0xf]
        %v274 = vld [vmem:[%s223 + $0x8] sm:$0x8]
        %v275 = vld [vmem:[%s223 + $0x1c] sm:$0x8]
        %v276 = vld [vmem:[%s223 + $0x30] sm:$0x8]
        %v277 = vld [vmem:[%s223 + $0x44] sm:$0x8]
        %s278 = scalar_lea.vmem %s223, 20
        %v279 = vld [vmem:[%s278] sm:$0xf]
        %v280 = vld [vmem:[%s278 + $0x14] sm:$0xf]
        %v281 = vld [vmem:[%s278 + $0x28] sm:$0xf]
        %v282 = vld [vmem:[%s278 + $0x3c] sm:$0xf]
        %v283 = vld [vmem:[%s278 + $0x4] sm:$0xe]
        %v284 = vld [vmem:[%s278 + $0x8] sm:$0x1]
        %v285 = vld [vmem:[%s278 + $0x18] sm:$0xe]
        %v286 = vld [vmem:[%s278 + $0x1c] sm:$0x1]
        %v287 = vld [vmem:[%s278 + $0x2c] sm:$0xe]
        %v288 = vld [vmem:[%s278 + $0x30] sm:$0x1]
        %v289 = vld [vmem:[%s278 + $0x40] sm:$0xe]
        %v290 = vld [vmem:[%s278 + $0x44] sm:$0x1]
        %v291 = vld [vmem:[%s278 + $0x4] sm:$0x1]
        %v292 = vld [vmem:[%s278 + $0x18] sm:$0x1]
        %v293 = vld [vmem:[%s278 + $0x2c] sm:$0x1]
        %v294 = vld [vmem:[%s278 + $0x40] sm:$0x1]
        %v295 = vld [vmem:[%s278 + $0x8] sm:$0x3]
        %v296 = vld [vmem:[%s278 + $0x1c] sm:$0x3]
        %v297 = vld [vmem:[%s278 + $0x30] sm:$0x3]
        %v298 = vld [vmem:[%s278 + $0x44] sm:$0x3]
        %v299 = vld [vmem:[%s278] sm:$0xe]
        %v300 = vld [vmem:[%s278 + $0x14] sm:$0xe]
        %v301 = vld [vmem:[%s278 + $0x28] sm:$0xe]
        %v302 = vld [vmem:[%s278 + $0x3c] sm:$0xe]
        %v303 = vld [vmem:[%s278 + $0x8] sm:$0xc]
        %v304 = vld [vmem:[%s278 + $0xc] sm:$0x3]
        %v305 = vld [vmem:[%s278 + $0x1c] sm:$0xc]
        %v306 = vld [vmem:[%s278 + $0x20] sm:$0x3]
        %v307 = vld [vmem:[%s278 + $0x30] sm:$0xc]
        %v308 = vld [vmem:[%s278 + $0x34] sm:$0x3]
        %v309 = vld [vmem:[%s278 + $0x44] sm:$0xc]
        %v310 = vld [vmem:[%s278 + $0x48] sm:$0x3]
        %v311 = vld [vmem:[%s278 + $0xc] sm:$0x8]
        %v312 = vld [vmem:[%s278 + $0x10] sm:$0x7]
        %v313 = vld [vmem:[%s278 + $0x20] sm:$0x8]
        %v314 = vld [vmem:[%s278 + $0x24] sm:$0x7]
        %v315 = vld [vmem:[%s278 + $0x34] sm:$0x8]
        %v316 = vld [vmem:[%s278 + $0x38] sm:$0x7]
        %v317 = vld [vmem:[%s278 + $0x48] sm:$0x8]
        %v318 = vld [vmem:[%s278 + $0x4c] sm:$0x7]
        %v319 = vld [vmem:[%s278 + $0xc] sm:$0x7]
        %v320 = vld [vmem:[%s278 + $0x20] sm:$0x7]
        %v321 = vld [vmem:[%s278 + $0x34] sm:$0x7]
        %v322 = vld [vmem:[%s278 + $0x48] sm:$0x7]
        %v323 = vld [vmem:[%s278 + $0x10] sm:$0xf]
        %v324 = vld [vmem:[%s278 + $0x24] sm:$0xf]
        %v325 = vld [vmem:[%s278 + $0x38] sm:$0xf]
        %v326 = vld [vmem:[%s278 + $0x4c] sm:$0xf]
        %v327 = vld [vmem:[%s278 + $0x8] sm:$0x8]
        %v328 = vld [vmem:[%s278 + $0x1c] sm:$0x8]
        %v329 = vld [vmem:[%s278 + $0x30] sm:$0x8]
        %v330 = vld [vmem:[%s278 + $0x44] sm:$0x8]
        %s331 = scalar_lea.vmem %s223, 40
        %v332 = vld [vmem:[%s331] sm:$0xf]
        %v333 = vld [vmem:[%s331 + $0x14] sm:$0xf]
        %v334 = vld [vmem:[%s331 + $0x28] sm:$0xf]
        %v335 = vld [vmem:[%s331 + $0x3c] sm:$0xf]
        %v336 = vld [vmem:[%s331 + $0x4] sm:$0xe]
        %v337 = vld [vmem:[%s331 + $0x8] sm:$0x1]
        %v338 = vld [vmem:[%s331 + $0x18] sm:$0xe]
        %v339 = vld [vmem:[%s331 + $0x1c] sm:$0x1]
        %v340 = vld [vmem:[%s331 + $0x2c] sm:$0xe]
        %v341 = vld [vmem:[%s331 + $0x30] sm:$0x1]
        %v342 = vld [vmem:[%s331 + $0x40] sm:$0xe]
        %v343 = vld [vmem:[%s331 + $0x44] sm:$0x1]
        %v344 = vld [vmem:[%s331 + $0x4] sm:$0x1]
        %v345 = vld [vmem:[%s331 + $0x18] sm:$0x1]
        %v346 = vld [vmem:[%s331 + $0x2c] sm:$0x1]
        %v347 = vld [vmem:[%s331 + $0x40] sm:$0x1]
        %v348 = vld [vmem:[%s331 + $0x8] sm:$0x3]
        %v349 = vld [vmem:[%s331 + $0x1c] sm:$0x3]
        %v350 = vld [vmem:[%s331 + $0x30] sm:$0x3]
        %v351 = vld [vmem:[%s331 + $0x44] sm:$0x3]
        %v352 = vld [vmem:[%s331] sm:$0xe]
        %v353 = vld [vmem:[%s331 + $0x14] sm:$0xe]
        %v354 = vld [vmem:[%s331 + $0x28] sm:$0xe]
        %v355 = vld [vmem:[%s331 + $0x3c] sm:$0xe]
        %v364 = vunpack.c.l.b16 %v230
        %v365 = vunpack.c.l.b16 %v231
        %v366 = vunpack.c.l.b16 %v232
        %v367 = vunpack.c.l.b16 %v233
        %v368 = vunpack.c.l.b16 %v234
        %v369 = vunpack.c.l.b16 %v235
        %v370 = vunpack.c.l.b16 %v236
        %v371 = vunpack.c.l.b16 %v237
        %v372 = vpack.c.b16 %v365, %v364
        %v373 = vpack.c.b16 %v367, %v366
        %v374 = vpack.c.b16 %v369, %v368
        %v375 = vpack.c.b16 %v371, %v370
        %v376 = vrot.slane %v372, 1
        %v377 = vrot.slane %v373, 1
        %v378 = vrot.slane %v374, 1
        %v379 = vrot.slane %v375, 1
        %380 = vrot.lane.b32.xlu0 %v376, 3
        %v381 = vpop.permute.xlu0 %380
        %382 = vrot.lane.b32.xlu0 %v377, 3
        %v383 = vpop.permute.xlu0 %382
        %384 = vrot.lane.b32.xlu0 %v378, 3
        %v385 = vpop.permute.xlu0 %384
        %386 = vrot.lane.b32.xlu0 %v379, 3
        %v387 = vpop.permute.xlu0 %386
        %v396 = vunpack.c.l.b16 %v226
        %v397 = vunpack.c.l.b16 %v238
        %v398 = vunpack.c.l.b16 %v227
        %v399 = vunpack.c.l.b16 %v239
        %v400 = vunpack.c.l.b16 %v228
        %v401 = vunpack.c.l.b16 %v240
        %v402 = vunpack.c.l.b16 %v229
        %v403 = vunpack.c.l.b16 %v241
        %v404 = vpack.c.b16 %v397, %v396
        %v405 = vpack.c.b16 %v399, %v398
        %v406 = vpack.c.b16 %v401, %v400
        %v407 = vpack.c.b16 %v403, %v402
        %v409 = vshrl.u32 %v404, 16
        %v411 = vshll.u32 %v404, 16
        %v413 = vrot.slane %v411, 1
        %v414 = vor.u32 %v409, %v413
        %v416 = vshrl.u32 %v405, 16
        %v418 = vshll.u32 %v405, 16
        %v420 = vrot.slane %v418, 1
        %v421 = vor.u32 %v416, %v420
        %v423 = vshrl.u32 %v406, 16
        %v425 = vshll.u32 %v406, 16
        %v427 = vrot.slane %v425, 1
        %v428 = vor.u32 %v423, %v427
        %v430 = vshrl.u32 %v407, 16
        %v432 = vshll.u32 %v407, 16
        %v434 = vrot.slane %v432, 1
        %v435 = vor.u32 %v430, %v434
        %436 = vrot.lane.b32.xlu0 %v414, 6
        %v437 = vpop.permute.xlu0 %436
        %438 = vrot.lane.b32.xlu0 %v421, 6
        %v439 = vpop.permute.xlu0 %438
        %440 = vrot.lane.b32.xlu0 %v428, 6
        %v441 = vpop.permute.xlu0 %440
        %442 = vrot.lane.b32.xlu0 %v435, 6
        %v443 = vpop.permute.xlu0 %442
        %v448 = vunpack.c.l.b16 %v242
        %v449 = vunpack.c.l.b16 %v243
        %v450 = vunpack.c.l.b16 %v244
        %v451 = vunpack.c.l.b16 %v245
        %v452 = vpack.c.b16 %v448, %v364
        %v453 = vpack.c.b16 %v449, %v366
        %v454 = vpack.c.b16 %v450, %v368
        %v455 = vpack.c.b16 %v451, %v370
        %v457 = vshrl.u32 %v452, 16
        %v459 = vrot.slane %v457, 1
        %v460 = vshll.u32 %v452, 16
        %v462 = vrot.slane %v460, 2
        %v463 = vor.u32 %v459, %v462
        %v465 = vshrl.u32 %v453, 16
        %v467 = vrot.slane %v465, 1
        %v468 = vshll.u32 %v453, 16
        %v470 = vrot.slane %v468, 2
        %v471 = vor.u32 %v467, %v470
        %v473 = vshrl.u32 %v454, 16
        %v475 = vrot.slane %v473, 1
        %v476 = vshll.u32 %v454, 16
        %v478 = vrot.slane %v476, 2
        %v479 = vor.u32 %v475, %v478
        %v481 = vshrl.u32 %v455, 16
        %v483 = vrot.slane %v481, 1
        %v484 = vshll.u32 %v455, 16
        %v486 = vrot.slane %v484, 2
        %v487 = vor.u32 %v483, %v486
        %488 = vrot.lane.b32.xlu0 %v463, 9
        %v489 = vpop.permute.xlu0 %488
        %490 = vrot.lane.b32.xlu0 %v471, 9
        %v491 = vpop.permute.xlu0 %490
        %492 = vrot.lane.b32.xlu0 %v479, 9
        %v493 = vpop.permute.xlu0 %492
        %494 = vrot.lane.b32.xlu0 %v487, 9
        %v495 = vpop.permute.xlu0 %494
        %v500 = vunpack.c.l.b16 %v246
        %v501 = vunpack.c.l.b16 %v247
        %v502 = vunpack.c.l.b16 %v248
        %v503 = vunpack.c.l.b16 %v249
        %v504 = vpack.c.b16 %v397, %v500
        %v505 = vpack.c.b16 %v399, %v501
        %v506 = vpack.c.b16 %v401, %v502
        %v507 = vpack.c.b16 %v403, %v503
        %v508 = vrot.slane %v504, 1
        %v509 = vrot.slane %v505, 1
        %v510 = vrot.slane %v506, 1
        %v511 = vrot.slane %v507, 1
        %512 = vrot.lane.b32.xlu0 %v508, 12
        %v513 = vpop.permute.xlu0 %512
        %514 = vrot.lane.b32.xlu0 %v509, 12
        %v515 = vpop.permute.xlu0 %514
        %516 = vrot.lane.b32.xlu0 %v510, 12
        %v517 = vpop.permute.xlu0 %516
        %518 = vrot.lane.b32.xlu0 %v511, 12
        %v519 = vpop.permute.xlu0 %518
        %v528 = vunpack.c.l.b16 %v250
        %v529 = vunpack.c.l.b16 %v251
        %v530 = vunpack.c.l.b16 %v252
        %v531 = vunpack.c.l.b16 %v253
        %v532 = vunpack.c.l.b16 %v254
        %v533 = vunpack.c.l.b16 %v255
        %v534 = vunpack.c.l.b16 %v256
        %v535 = vunpack.c.l.b16 %v257
        %v536 = vpack.c.b16 %v529, %v528
        %v537 = vpack.c.b16 %v531, %v530
        %v538 = vpack.c.b16 %v533, %v532
        %v539 = vpack.c.b16 %v535, %v534
        %v540 = vrot.slane %v536, 2
        %v541 = vrot.slane %v537, 2
        %v542 = vrot.slane %v538, 2
        %v543 = vrot.slane %v539, 2
        %544 = vrot.lane.b32.xlu0 %v540, 15
        %v545 = vpop.permute.xlu0 %544
        %546 = vrot.lane.b32.xlu0 %v541, 15
        %v547 = vpop.permute.xlu0 %546
        %548 = vrot.lane.b32.xlu0 %v542, 15
        %v549 = vpop.permute.xlu0 %548
        %550 = vrot.lane.b32.xlu0 %v543, 15
        %v551 = vpop.permute.xlu0 %550
        %v560 = vunpack.c.l.b16 %v258
        %v561 = vunpack.c.l.b16 %v259
        %v562 = vunpack.c.l.b16 %v260
        %v563 = vunpack.c.l.b16 %v261
        %v564 = vunpack.c.l.b16 %v262
        %v565 = vunpack.c.l.b16 %v263
        %v566 = vunpack.c.l.b16 %v264
        %v567 = vunpack.c.l.b16 %v265
        %v568 = vpack.c.b16 %v561, %v560
        %v569 = vpack.c.b16 %v563, %v562
        %v570 = vpack.c.b16 %v565, %v564
        %v571 = vpack.c.b16 %v567, %v566
        %v572 = vrot.slane %v568, 3
        %v573 = vrot.slane %v569, 3
        %v574 = vrot.slane %v570, 3
        %v575 = vrot.slane %v571, 3
        %576 = vrot.lane.b32.xlu0 %v572, 18
        %v577 = vpop.permute.xlu0 %576
        %578 = vrot.lane.b32.xlu0 %v573, 18
        %v579 = vpop.permute.xlu0 %578
        %580 = vrot.lane.b32.xlu0 %v574, 18
        %v581 = vpop.permute.xlu0 %580
        %582 = vrot.lane.b32.xlu0 %v575, 18
        %v583 = vpop.permute.xlu0 %582
        %v588 = vunpack.c.l.b16 %v266
        %v589 = vunpack.c.l.b16 %v267
        %v590 = vunpack.c.l.b16 %v268
        %v591 = vunpack.c.l.b16 %v269
        %v592 = vpack.c.b16 %v588, %v528
        %v593 = vpack.c.b16 %v589, %v530
        %v594 = vpack.c.b16 %v590, %v532
        %v595 = vpack.c.b16 %v591, %v534
        %v597 = vshrl.u32 %v592, 16
        %v599 = vrot.slane %v597, 2
        %v600 = vshll.u32 %v592, 16
        %v602 = vrot.slane %v600, 3
        %v603 = vor.u32 %v599, %v602
        %v605 = vshrl.u32 %v593, 16
        %v607 = vrot.slane %v605, 2
        %v608 = vshll.u32 %v593, 16
        %v610 = vrot.slane %v608, 3
        %v611 = vor.u32 %v607, %v610
        %v613 = vshrl.u32 %v594, 16
        %v615 = vrot.slane %v613, 2
        %v616 = vshll.u32 %v594, 16
        %v618 = vrot.slane %v616, 3
        %v619 = vor.u32 %v615, %v618
        %v621 = vshrl.u32 %v595, 16
        %v623 = vrot.slane %v621, 2
        %v624 = vshll.u32 %v595, 16
        %v626 = vrot.slane %v624, 3
        %v627 = vor.u32 %v623, %v626
        %628 = vrot.lane.b32.xlu0 %v603, 21
        %v629 = vpop.permute.xlu0 %628
        %630 = vrot.lane.b32.xlu0 %v611, 21
        %v631 = vpop.permute.xlu0 %630
        %632 = vrot.lane.b32.xlu0 %v619, 21
        %v633 = vpop.permute.xlu0 %632
        %634 = vrot.lane.b32.xlu0 %v627, 21
        %v635 = vpop.permute.xlu0 %634
        %v640 = vunpack.c.l.b16 %v270
        %v641 = vunpack.c.l.b16 %v271
        %v642 = vunpack.c.l.b16 %v272
        %v643 = vunpack.c.l.b16 %v273
        %v644 = vpack.c.b16 %v640, %v560
        %v645 = vpack.c.b16 %v641, %v562
        %v646 = vpack.c.b16 %v642, %v564
        %v647 = vpack.c.b16 %v643, %v566
        %v649 = vshrl.u32 %v644, 16
        %v651 = vrot.slane %v649, 3
        %v652 = vshll.u32 %v644, 16
        %v654 = vrot.slane %v652, 4
        %v655 = vor.u32 %v651, %v654
        %v657 = vshrl.u32 %v645, 16
        %v659 = vrot.slane %v657, 3
        %v660 = vshll.u32 %v645, 16
        %v662 = vrot.slane %v660, 4
        %v663 = vor.u32 %v659, %v662
        %v665 = vshrl.u32 %v646, 16
        %v667 = vrot.slane %v665, 3
        %v668 = vshll.u32 %v646, 16
        %v670 = vrot.slane %v668, 4
        %v671 = vor.u32 %v667, %v670
        %v673 = vshrl.u32 %v647, 16
        %v675 = vrot.slane %v673, 3
        %v676 = vshll.u32 %v647, 16
        %v678 = vrot.slane %v676, 4
        %v679 = vor.u32 %v675, %v678
        %680 = vrot.lane.b32.xlu0 %v655, 24
        %v681 = vpop.permute.xlu0 %680
        %682 = vrot.lane.b32.xlu0 %v663, 24
        %v683 = vpop.permute.xlu0 %682
        %684 = vrot.lane.b32.xlu0 %v671, 24
        %v685 = vpop.permute.xlu0 %684
        %686 = vrot.lane.b32.xlu0 %v679, 24
        %v687 = vpop.permute.xlu0 %686
        %v692 = vunpack.c.l.b16 %v274
        %v693 = vunpack.c.l.b16 %v275
        %v694 = vunpack.c.l.b16 %v276
        %v695 = vunpack.c.l.b16 %v277
        %v696 = vpack.c.b16 %v588, %v692
        %v697 = vpack.c.b16 %v589, %v693
        %v698 = vpack.c.b16 %v590, %v694
        %v699 = vpack.c.b16 %v591, %v695
        %v700 = vrot.slane %v696, 3
        %v701 = vrot.slane %v697, 3
        %v702 = vrot.slane %v698, 3
        %v703 = vrot.slane %v699, 3
        %704 = vrot.lane.b32.xlu0 %v700, 27
        %v705 = vpop.permute.xlu0 %704
        %706 = vrot.lane.b32.xlu0 %v701, 27
        %v707 = vpop.permute.xlu0 %706
        %708 = vrot.lane.b32.xlu0 %v702, 27
        %v709 = vpop.permute.xlu0 %708
        %710 = vrot.lane.b32.xlu0 %v703, 27
        %v711 = vpop.permute.xlu0 %710
        %v716 = vunpack.c.l.b16 %v279
        %v717 = vunpack.c.l.b16 %v280
        %v718 = vunpack.c.l.b16 %v281
        %v719 = vunpack.c.l.b16 %v282
        %v720 = vpack.c.b16 %v716, %v716
        %v721 = vpack.c.b16 %v717, %v717
        %v722 = vpack.c.b16 %v718, %v718
        %v723 = vpack.c.b16 %v719, %v719
        %724 = vrot.lane.b32.xlu0 %v720, 30
        %v725 = vpop.permute.xlu0 %724
        %726 = vrot.lane.b32.xlu0 %v721, 30
        %v727 = vpop.permute.xlu0 %726
        %728 = vrot.lane.b32.xlu0 %v722, 30
        %v729 = vpop.permute.xlu0 %728
        %730 = vrot.lane.b32.xlu0 %v723, 30
        %v731 = vpop.permute.xlu0 %730
        %v740 = vunpack.c.l.b16 %v283
        %v741 = vunpack.c.l.b16 %v284
        %v742 = vunpack.c.l.b16 %v285
        %v743 = vunpack.c.l.b16 %v286
        %v744 = vunpack.c.l.b16 %v287
        %v745 = vunpack.c.l.b16 %v288
        %v746 = vunpack.c.l.b16 %v289
        %v747 = vunpack.c.l.b16 %v290
        %v748 = vpack.c.b16 %v741, %v740
        %v749 = vpack.c.b16 %v743, %v742
        %v750 = vpack.c.b16 %v745, %v744
        %v751 = vpack.c.b16 %v747, %v746
        %v752 = vrot.slane %v748, 1
        %v753 = vrot.slane %v749, 1
        %v754 = vrot.slane %v750, 1
        %v755 = vrot.slane %v751, 1
        %756 = vrot.lane.b32.xlu0 %v752, 33
        %v757 = vpop.permute.xlu0 %756
        %758 = vrot.lane.b32.xlu0 %v753, 33
        %v759 = vpop.permute.xlu0 %758
        %760 = vrot.lane.b32.xlu0 %v754, 33
        %v761 = vpop.permute.xlu0 %760
        %762 = vrot.lane.b32.xlu0 %v755, 33
        %v763 = vpop.permute.xlu0 %762
        %v768 = vunpack.c.l.b16 %v291
        %v769 = vunpack.c.l.b16 %v292
        %v770 = vunpack.c.l.b16 %v293
        %v771 = vunpack.c.l.b16 %v294
        %v772 = vpack.c.b16 %v768, %v716
        %v773 = vpack.c.b16 %v769, %v717
        %v774 = vpack.c.b16 %v770, %v718
        %v775 = vpack.c.b16 %v771, %v719
        %v777 = vshrl.u32 %v772, 16
        %v779 = vshll.u32 %v772, 16
        %v781 = vrot.slane %v779, 1
        %v782 = vor.u32 %v777, %v781
        %v784 = vshrl.u32 %v773, 16
        %v786 = vshll.u32 %v773, 16
        %v788 = vrot.slane %v786, 1
        %v789 = vor.u32 %v784, %v788
        %v791 = vshrl.u32 %v774, 16
        %v793 = vshll.u32 %v774, 16
        %v795 = vrot.slane %v793, 1
        %v796 = vor.u32 %v791, %v795
        %v798 = vshrl.u32 %v775, 16
        %v800 = vshll.u32 %v775, 16
        %v802 = vrot.slane %v800, 1
        %v803 = vor.u32 %v798, %v802
        %804 = vrot.lane.b32.xlu0 %v782, 36
        %v805 = vpop.permute.xlu0 %804
        %806 = vrot.lane.b32.xlu0 %v789, 36
        %v807 = vpop.permute.xlu0 %806
        %808 = vrot.lane.b32.xlu0 %v796, 36
        %v809 = vpop.permute.xlu0 %808
        %810 = vrot.lane.b32.xlu0 %v803, 36
        %v811 = vpop.permute.xlu0 %810
        %v816 = vunpack.c.l.b16 %v295
        %v817 = vunpack.c.l.b16 %v296
        %v818 = vunpack.c.l.b16 %v297
        %v819 = vunpack.c.l.b16 %v298
        %v820 = vpack.c.b16 %v816, %v740
        %v821 = vpack.c.b16 %v817, %v742
        %v822 = vpack.c.b16 %v818, %v744
        %v823 = vpack.c.b16 %v819, %v746
        %v825 = vshrl.u32 %v820, 16
        %v827 = vrot.slane %v825, 1
        %v828 = vshll.u32 %v820, 16
        %v830 = vrot.slane %v828, 2
        %v831 = vor.u32 %v827, %v830
        %v833 = vshrl.u32 %v821, 16
        %v835 = vrot.slane %v833, 1
        %v836 = vshll.u32 %v821, 16
        %v838 = vrot.slane %v836, 2
        %v839 = vor.u32 %v835, %v838
        %v841 = vshrl.u32 %v822, 16
        %v843 = vrot.slane %v841, 1
        %v844 = vshll.u32 %v822, 16
        %v846 = vrot.slane %v844, 2
        %v847 = vor.u32 %v843, %v846
        %v849 = vshrl.u32 %v823, 16
        %v851 = vrot.slane %v849, 1
        %v852 = vshll.u32 %v823, 16
        %v854 = vrot.slane %v852, 2
        %v855 = vor.u32 %v851, %v854
        %856 = vrot.lane.b32.xlu0 %v831, 39
        %v857 = vpop.permute.xlu0 %856
        %858 = vrot.lane.b32.xlu0 %v839, 39
        %v859 = vpop.permute.xlu0 %858
        %860 = vrot.lane.b32.xlu0 %v847, 39
        %v861 = vpop.permute.xlu0 %860
        %862 = vrot.lane.b32.xlu0 %v855, 39
        %v863 = vpop.permute.xlu0 %862
        %v868 = vunpack.c.l.b16 %v299
        %v869 = vunpack.c.l.b16 %v300
        %v870 = vunpack.c.l.b16 %v301
        %v871 = vunpack.c.l.b16 %v302
        %v872 = vpack.c.b16 %v768, %v868
        %v873 = vpack.c.b16 %v769, %v869
        %v874 = vpack.c.b16 %v770, %v870
        %v875 = vpack.c.b16 %v771, %v871
        %v876 = vrot.slane %v872, 1
        %v877 = vrot.slane %v873, 1
        %v878 = vrot.slane %v874, 1
        %v879 = vrot.slane %v875, 1
        %880 = vrot.lane.b32.xlu0 %v876, 42
        %v881 = vpop.permute.xlu0 %880
        %882 = vrot.lane.b32.xlu0 %v877, 42
        %v883 = vpop.permute.xlu0 %882
        %884 = vrot.lane.b32.xlu0 %v878, 42
        %v885 = vpop.permute.xlu0 %884
        %886 = vrot.lane.b32.xlu0 %v879, 42
        %v887 = vpop.permute.xlu0 %886
        %v896 = vunpack.c.l.b16 %v303
        %v897 = vunpack.c.l.b16 %v304
        %v898 = vunpack.c.l.b16 %v305
        %v899 = vunpack.c.l.b16 %v306
        %v900 = vunpack.c.l.b16 %v307
        %v901 = vunpack.c.l.b16 %v308
        %v902 = vunpack.c.l.b16 %v309
        %v903 = vunpack.c.l.b16 %v310
        %v904 = vpack.c.b16 %v897, %v896
        %v905 = vpack.c.b16 %v899, %v898
        %v906 = vpack.c.b16 %v901, %v900
        %v907 = vpack.c.b16 %v903, %v902
        %v908 = vrot.slane %v904, 2
        %v909 = vrot.slane %v905, 2
        %v910 = vrot.slane %v906, 2
        %v911 = vrot.slane %v907, 2
        %912 = vrot.lane.b32.xlu0 %v908, 45
        %v913 = vpop.permute.xlu0 %912
        %914 = vrot.lane.b32.xlu0 %v909, 45
        %v915 = vpop.permute.xlu0 %914
        %916 = vrot.lane.b32.xlu0 %v910, 45
        %v917 = vpop.permute.xlu0 %916
        %918 = vrot.lane.b32.xlu0 %v911, 45
        %v919 = vpop.permute.xlu0 %918
        %vm920 = vcmask 23552
        %v923 = vsel %vm920, %v226, %v381
        %v926 = vsel %vm920, %v227, %v383
        %v929 = vsel %vm920, %v228, %v385
        %v932 = vsel %vm920, %v229, %v387
        %vm933 = vcmask 48128
        %v935 = vsel %vm933, %v923, %v437
        %v937 = vsel %vm933, %v926, %v439
        %v939 = vsel %vm933, %v929, %v441
        %v941 = vsel %vm933, %v932, %v443
        %vm942 = vcmask 72704
        %v944 = vsel %vm942, %v935, %v489
        %v946 = vsel %vm942, %v937, %v491
        %v948 = vsel %vm942, %v939, %v493
        %v950 = vsel %vm942, %v941, %v495
        %vm951 = vcmask 97280
        %v953 = vsel %vm951, %v944, %v513
        %v955 = vsel %vm951, %v946, %v515
        %v957 = vsel %vm951, %v948, %v517
        %v959 = vsel %vm951, %v950, %v519
        %vm960 = vcmask 121856
        %v962 = vsel %vm960, %v953, %v545
        %v964 = vsel %vm960, %v955, %v547
        %v966 = vsel %vm960, %v957, %v549
        %v968 = vsel %vm960, %v959, %v551
        %vm969 = vcmask 146432
        %v971 = vsel %vm969, %v962, %v577
        %v973 = vsel %vm969, %v964, %v579
        %v975 = vsel %vm969, %v966, %v581
        %v977 = vsel %vm969, %v968, %v583
        %vm978 = vcmask 171008
        %v980 = vsel %vm978, %v971, %v629
        %v982 = vsel %vm978, %v973, %v631
        %v984 = vsel %vm978, %v975, %v633
        %v986 = vsel %vm978, %v977, %v635
        %vm987 = vcmask 195584
        %v989 = vsel %vm987, %v980, %v681
        %v991 = vsel %vm987, %v982, %v683
        %v993 = vsel %vm987, %v984, %v685
        %v995 = vsel %vm987, %v986, %v687
        %vm996 = vcmask 220160
        %v998 = vsel %vm996, %v989, %v705
        %v1000 = vsel %vm996, %v991, %v707
        %v1002 = vsel %vm996, %v993, %v709
        %v1004 = vsel %vm996, %v995, %v711
        %vm1005 = vcmask 244736
        %v1007 = vsel %vm1005, %v998, %v725
        %v1009 = vsel %vm1005, %v1000, %v727
        %v1011 = vsel %vm1005, %v1002, %v729
        %v1013 = vsel %vm1005, %v1004, %v731
        %vm1014 = vcmask 269312
        %v1016 = vsel %vm1014, %v1007, %v757
        %v1018 = vsel %vm1014, %v1009, %v759
        %v1020 = vsel %vm1014, %v1011, %v761
        %v1022 = vsel %vm1014, %v1013, %v763
        %vm1023 = vcmask 293888
        %v1025 = vsel %vm1023, %v1016, %v805
        %v1027 = vsel %vm1023, %v1018, %v807
        %v1029 = vsel %vm1023, %v1020, %v809
        %v1031 = vsel %vm1023, %v1022, %v811
        %vm1032 = vcmask 318464
        %v1034 = vsel %vm1032, %v1025, %v857
        %v1036 = vsel %vm1032, %v1027, %v859
        %v1038 = vsel %vm1032, %v1029, %v861
        %v1040 = vsel %vm1032, %v1031, %v863
        %vm1041 = vcmask 343040
        %v1043 = vsel %vm1041, %v1034, %v881
        %v1045 = vsel %vm1041, %v1036, %v883
        %v1047 = vsel %vm1041, %v1038, %v885
        %v1049 = vsel %vm1041, %v1040, %v887
        %vm1050 = vcmask 367616
        %v1052 = vsel %vm1050, %v1043, %v913
        %v1054 = vsel %vm1050, %v1045, %v915
        %v1056 = vsel %vm1050, %v1047, %v917
        %v1058 = vsel %vm1050, %v1049, %v919
        %v1067 = vunpack.c.l.b16 %v311
        %v1068 = vunpack.c.l.b16 %v312
        %v1069 = vunpack.c.l.b16 %v313
        %v1070 = vunpack.c.l.b16 %v314
        %v1071 = vunpack.c.l.b16 %v315
        %v1072 = vunpack.c.l.b16 %v316
        %v1073 = vunpack.c.l.b16 %v317
        %v1074 = vunpack.c.l.b16 %v318
        %v1075 = vpack.c.b16 %v1068, %v1067
        %v1076 = vpack.c.b16 %v1070, %v1069
        %v1077 = vpack.c.b16 %v1072, %v1071
        %v1078 = vpack.c.b16 %v1074, %v1073
        %v1083 = vunpack.c.l.b16 %v319
        %v1084 = vunpack.c.l.b16 %v320
        %v1085 = vunpack.c.l.b16 %v321
        %v1086 = vunpack.c.l.b16 %v322
        %v1087 = vpack.c.b16 %v1083, %v896
        %v1088 = vpack.c.b16 %v1084, %v898
        %v1089 = vpack.c.b16 %v1085, %v900
        %v1090 = vpack.c.b16 %v1086, %v902
        %v1092 = vshrl.u32 %v1087, 16
        %v1094 = vrot.slane %v1092, 7
        %v1095 = vshll.u32 %v1087, 16
        %v1097 = vor.u32 %v1094, %v1095
        %v1099 = vshrl.u32 %v1088, 16
        %v1101 = vrot.slane %v1099, 7
        %v1102 = vshll.u32 %v1088, 16
        %v1104 = vor.u32 %v1101, %v1102
        %v1106 = vshrl.u32 %v1089, 16
        %v1108 = vrot.slane %v1106, 7
        %v1109 = vshll.u32 %v1089, 16
        %v1111 = vor.u32 %v1108, %v1109
        %v1113 = vshrl.u32 %v1090, 16
        %v1115 = vrot.slane %v1113, 7
        %v1116 = vshll.u32 %v1090, 16
        %v1118 = vor.u32 %v1115, %v1116
        %1119 = vrot.lane.b32.xlu0 %v1097, 3
        %v1120 = vpop.permute.xlu0 %1119
        %1121 = vrot.lane.b32.xlu0 %v1104, 3
        %v1122 = vpop.permute.xlu0 %1121
        %1123 = vrot.lane.b32.xlu0 %v1111, 3
        %v1124 = vpop.permute.xlu0 %1123
        %1125 = vrot.lane.b32.xlu0 %v1118, 3
        %v1126 = vpop.permute.xlu0 %1125
        %v1131 = vunpack.c.l.b16 %v323
        %v1132 = vunpack.c.l.b16 %v324
        %v1133 = vunpack.c.l.b16 %v325
        %v1134 = vunpack.c.l.b16 %v326
        %v1135 = vpack.c.b16 %v1131, %v1067
        %v1136 = vpack.c.b16 %v1132, %v1069
        %v1137 = vpack.c.b16 %v1133, %v1071
        %v1138 = vpack.c.b16 %v1134, %v1073
        %v1140 = vshrl.u32 %v1135, 16
        %v1142 = vshll.u32 %v1135, 16
        %v1144 = vrot.slane %v1142, 1
        %v1145 = vor.u32 %v1140, %v1144
        %v1147 = vshrl.u32 %v1136, 16
        %v1149 = vshll.u32 %v1136, 16
        %v1151 = vrot.slane %v1149, 1
        %v1152 = vor.u32 %v1147, %v1151
        %v1154 = vshrl.u32 %v1137, 16
        %v1156 = vshll.u32 %v1137, 16
        %v1158 = vrot.slane %v1156, 1
        %v1159 = vor.u32 %v1154, %v1158
        %v1161 = vshrl.u32 %v1138, 16
        %v1163 = vshll.u32 %v1138, 16
        %v1165 = vrot.slane %v1163, 1
        %v1166 = vor.u32 %v1161, %v1165
        %1167 = vrot.lane.b32.xlu0 %v1145, 6
        %v1168 = vpop.permute.xlu0 %1167
        %1169 = vrot.lane.b32.xlu0 %v1152, 6
        %v1170 = vpop.permute.xlu0 %1169
        %1171 = vrot.lane.b32.xlu0 %v1159, 6
        %v1172 = vpop.permute.xlu0 %1171
        %1173 = vrot.lane.b32.xlu0 %v1166, 6
        %v1174 = vpop.permute.xlu0 %1173
        %v1179 = vunpack.c.l.b16 %v327
        %v1180 = vunpack.c.l.b16 %v328
        %v1181 = vunpack.c.l.b16 %v329
        %v1182 = vunpack.c.l.b16 %v330
        %v1183 = vpack.c.b16 %v1083, %v1179
        %v1184 = vpack.c.b16 %v1084, %v1180
        %v1185 = vpack.c.b16 %v1085, %v1181
        %v1186 = vpack.c.b16 %v1086, %v1182
        %1187 = vrot.lane.b32.xlu0 %v1183, 9
        %v1188 = vpop.permute.xlu0 %1187
        %1189 = vrot.lane.b32.xlu0 %v1184, 9
        %v1190 = vpop.permute.xlu0 %1189
        %1191 = vrot.lane.b32.xlu0 %v1185, 9
        %v1192 = vpop.permute.xlu0 %1191
        %1193 = vrot.lane.b32.xlu0 %v1186, 9
        %v1194 = vpop.permute.xlu0 %1193
        %v1199 = vunpack.c.l.b16 %v332
        %v1200 = vunpack.c.l.b16 %v333
        %v1201 = vunpack.c.l.b16 %v334
        %v1202 = vunpack.c.l.b16 %v335
        %v1203 = vpack.c.b16 %v1199, %v1199
        %v1204 = vpack.c.b16 %v1200, %v1200
        %v1205 = vpack.c.b16 %v1201, %v1201
        %v1206 = vpack.c.b16 %v1202, %v1202
        %v1207 = vrot.slane %v1203, 5
        %v1208 = vrot.slane %v1204, 5
        %v1209 = vrot.slane %v1205, 5
        %v1210 = vrot.slane %v1206, 5
        %1211 = vrot.lane.b32.xlu0 %v1207, 12
        %v1212 = vpop.permute.xlu0 %1211
        %1213 = vrot.lane.b32.xlu0 %v1208, 12
        %v1214 = vpop.permute.xlu0 %1213
        %1215 = vrot.lane.b32.xlu0 %v1209, 12
        %v1216 = vpop.permute.xlu0 %1215
        %1217 = vrot.lane.b32.xlu0 %v1210, 12
        %v1218 = vpop.permute.xlu0 %1217
        %v1227 = vunpack.c.l.b16 %v336
        %v1228 = vunpack.c.l.b16 %v337
        %v1229 = vunpack.c.l.b16 %v338
        %v1230 = vunpack.c.l.b16 %v339
        %v1231 = vunpack.c.l.b16 %v340
        %v1232 = vunpack.c.l.b16 %v341
        %v1233 = vunpack.c.l.b16 %v342
        %v1234 = vunpack.c.l.b16 %v343
        %v1235 = vpack.c.b16 %v1228, %v1227
        %v1236 = vpack.c.b16 %v1230, %v1229
        %v1237 = vpack.c.b16 %v1232, %v1231
        %v1238 = vpack.c.b16 %v1234, %v1233
        %v1239 = vrot.slane %v1235, 6
        %v1240 = vrot.slane %v1236, 6
        %v1241 = vrot.slane %v1237, 6
        %v1242 = vrot.slane %v1238, 6
        %1243 = vrot.lane.b32.xlu0 %v1239, 15
        %v1244 = vpop.permute.xlu0 %1243
        %1245 = vrot.lane.b32.xlu0 %v1240, 15
        %v1246 = vpop.permute.xlu0 %1245
        %1247 = vrot.lane.b32.xlu0 %v1241, 15
        %v1248 = vpop.permute.xlu0 %1247
        %1249 = vrot.lane.b32.xlu0 %v1242, 15
        %v1250 = vpop.permute.xlu0 %1249
        %v1255 = vunpack.c.l.b16 %v344
        %v1256 = vunpack.c.l.b16 %v345
        %v1257 = vunpack.c.l.b16 %v346
        %v1258 = vunpack.c.l.b16 %v347
        %v1259 = vpack.c.b16 %v1255, %v1199
        %v1260 = vpack.c.b16 %v1256, %v1200
        %v1261 = vpack.c.b16 %v1257, %v1201
        %v1262 = vpack.c.b16 %v1258, %v1202
        %v1264 = vshrl.u32 %v1259, 16
        %v1266 = vrot.slane %v1264, 5
        %v1267 = vshll.u32 %v1259, 16
        %v1269 = vrot.slane %v1267, 6
        %v1270 = vor.u32 %v1266, %v1269
        %v1272 = vshrl.u32 %v1260, 16
        %v1274 = vrot.slane %v1272, 5
        %v1275 = vshll.u32 %v1260, 16
        %v1277 = vrot.slane %v1275, 6
        %v1278 = vor.u32 %v1274, %v1277
        %v1280 = vshrl.u32 %v1261, 16
        %v1282 = vrot.slane %v1280, 5
        %v1283 = vshll.u32 %v1261, 16
        %v1285 = vrot.slane %v1283, 6
        %v1286 = vor.u32 %v1282, %v1285
        %v1288 = vshrl.u32 %v1262, 16
        %v1290 = vrot.slane %v1288, 5
        %v1291 = vshll.u32 %v1262, 16
        %v1293 = vrot.slane %v1291, 6
        %v1294 = vor.u32 %v1290, %v1293
        %1295 = vrot.lane.b32.xlu0 %v1270, 18
        %v1296 = vpop.permute.xlu0 %1295
        %1297 = vrot.lane.b32.xlu0 %v1278, 18
        %v1298 = vpop.permute.xlu0 %1297
        %1299 = vrot.lane.b32.xlu0 %v1286, 18
        %v1300 = vpop.permute.xlu0 %1299
        %1301 = vrot.lane.b32.xlu0 %v1294, 18
        %v1302 = vpop.permute.xlu0 %1301
        %v1307 = vunpack.c.l.b16 %v348
        %v1308 = vunpack.c.l.b16 %v349
        %v1309 = vunpack.c.l.b16 %v350
        %v1310 = vunpack.c.l.b16 %v351
        %v1311 = vpack.c.b16 %v1307, %v1227
        %v1312 = vpack.c.b16 %v1308, %v1229
        %v1313 = vpack.c.b16 %v1309, %v1231
        %v1314 = vpack.c.b16 %v1310, %v1233
        %v1316 = vshrl.u32 %v1311, 16
        %v1318 = vrot.slane %v1316, 6
        %v1319 = vshll.u32 %v1311, 16
        %v1321 = vrot.slane %v1319, 7
        %v1322 = vor.u32 %v1318, %v1321
        %v1324 = vshrl.u32 %v1312, 16
        %v1326 = vrot.slane %v1324, 6
        %v1327 = vshll.u32 %v1312, 16
        %v1329 = vrot.slane %v1327, 7
        %v1330 = vor.u32 %v1326, %v1329
        %v1332 = vshrl.u32 %v1313, 16
        %v1334 = vrot.slane %v1332, 6
        %v1335 = vshll.u32 %v1313, 16
        %v1337 = vrot.slane %v1335, 7
        %v1338 = vor.u32 %v1334, %v1337
        %v1340 = vshrl.u32 %v1314, 16
        %v1342 = vrot.slane %v1340, 6
        %v1343 = vshll.u32 %v1314, 16
        %v1345 = vrot.slane %v1343, 7
        %v1346 = vor.u32 %v1342, %v1345
        %1347 = vrot.lane.b32.xlu0 %v1322, 21
        %v1348 = vpop.permute.xlu0 %1347
        %1349 = vrot.lane.b32.xlu0 %v1330, 21
        %v1350 = vpop.permute.xlu0 %1349
        %1351 = vrot.lane.b32.xlu0 %v1338, 21
        %v1352 = vpop.permute.xlu0 %1351
        %1353 = vrot.lane.b32.xlu0 %v1346, 21
        %v1354 = vpop.permute.xlu0 %1353
        %v1359 = vunpack.c.l.b16 %v352
        %v1360 = vunpack.c.l.b16 %v353
        %v1361 = vunpack.c.l.b16 %v354
        %v1362 = vunpack.c.l.b16 %v355
        %v1363 = vpack.c.b16 %v1255, %v1359
        %v1364 = vpack.c.b16 %v1256, %v1360
        %v1365 = vpack.c.b16 %v1257, %v1361
        %v1366 = vpack.c.b16 %v1258, %v1362
        %v1367 = vrot.slane %v1363, 6
        %v1368 = vrot.slane %v1364, 6
        %v1369 = vrot.slane %v1365, 6
        %v1370 = vrot.slane %v1366, 6
        %1371 = vrot.lane.b32.xlu0 %v1367, 24
        %v1372 = vpop.permute.xlu0 %1371
        %1373 = vrot.lane.b32.xlu0 %v1368, 24
        %v1374 = vpop.permute.xlu0 %1373
        %1375 = vrot.lane.b32.xlu0 %v1369, 24
        %v1376 = vpop.permute.xlu0 %1375
        %1377 = vrot.lane.b32.xlu0 %v1370, 24
        %v1378 = vpop.permute.xlu0 %1377
        %v1381 = vsel %vm920, %v1075, %v1120
        %v1384 = vsel %vm920, %v1076, %v1122
        %v1387 = vsel %vm920, %v1077, %v1124
        %v1390 = vsel %vm920, %v1078, %v1126
        %v1392 = vsel %vm933, %v1381, %v1168
        %v1394 = vsel %vm933, %v1384, %v1170
        %v1396 = vsel %vm933, %v1387, %v1172
        %v1398 = vsel %vm933, %v1390, %v1174
        %v1400 = vsel %vm942, %v1392, %v1188
        %v1402 = vsel %vm942, %v1394, %v1190
        %v1404 = vsel %vm942, %v1396, %v1192
        %v1406 = vsel %vm942, %v1398, %v1194
        %v1408 = vsel %vm951, %v1400, %v1212
        %v1410 = vsel %vm951, %v1402, %v1214
        %v1412 = vsel %vm951, %v1404, %v1216
        %v1414 = vsel %vm951, %v1406, %v1218
        %v1416 = vsel %vm960, %v1408, %v1244
        %v1418 = vsel %vm960, %v1410, %v1246
        %v1420 = vsel %vm960, %v1412, %v1248
        %v1422 = vsel %vm960, %v1414, %v1250
        %v1424 = vsel %vm969, %v1416, %v1296
        %v1426 = vsel %vm969, %v1418, %v1298
        %v1428 = vsel %vm969, %v1420, %v1300
        %v1430 = vsel %vm969, %v1422, %v1302
        %v1432 = vsel %vm978, %v1424, %v1348
        %v1434 = vsel %vm978, %v1426, %v1350
        %v1436 = vsel %vm978, %v1428, %v1352
        %v1438 = vsel %vm978, %v1430, %v1354
        %v1440 = vsel %vm987, %v1432, %v1372
        %v1442 = vsel %vm987, %v1434, %v1374
        %v1444 = vsel %vm987, %v1436, %v1376
        %v1446 = vsel %vm987, %v1438, %v1378
        %v1451 = vrot.slane %v1440, 3
        %v1452 = vrot.slane %v1442, 3
        %v1453 = vrot.slane %v1444, 3
        %v1454 = vrot.slane %v1446, 3
        %1455 = vrot.lane.b32.xlu0 %v1451, 48
        %v1456 = vpop.permute.xlu0 %1455
        %1457 = vrot.lane.b32.xlu0 %v1452, 48
        %v1458 = vpop.permute.xlu0 %1457
        %1459 = vrot.lane.b32.xlu0 %v1453, 48
        %v1460 = vpop.permute.xlu0 %1459
        %1461 = vrot.lane.b32.xlu0 %v1454, 48
        %v1462 = vpop.permute.xlu0 %1461
        %vm1463 = vcmask 392192
        %v1465 = vsel %vm1463, %v1052, %v1456
        %v1467 = vsel %vm1463, %v1054, %v1458
        %v1469 = vsel %vm1463, %v1056, %v1460
        %v1471 = vsel %vm1463, %v1058, %v1462
        %v1472 = vld [vmem:[%s1] sm:$0xf]
        %v1473 = vld [vmem:[%s1 + $0x4] sm:$0xf]
        %v1474 = vld [vmem:[%s1 + $0x8] sm:$0xf]
        %v1475 = vld [vmem:[%s1 + $0xc] sm:$0xf]
        %v1476 = vld [vmem:[%s1 + $0x10] sm:$0xf]
        %v1477 = vld [vmem:[%s1 + $0x14] sm:$0xf]
        %v1478 = vld [vmem:[%s1 + $0x18] sm:$0xf]
        %v1479 = vld [vmem:[%s1 + $0x1c] sm:$0xf]
        %v1480 = vld [vmem:[%s1 + $0x20] sm:$0xf]
        %v1481 = vld [vmem:[%s1 + $0x24] sm:$0x3]
        %v1486 = vunpack.c.l.b16 %v1465
        %v1487 = vunpack.c.l.b16 %v1467
        %v1488 = vunpack.c.l.b16 %v1469
        %v1489 = vunpack.c.l.b16 %v1471
        %v1490 = vpack.c.b16 %v1487, %v1486
        %v1491 = vpack.c.b16 %v1489, %v1488
        %v1502 = vunpack.c.l.b16 %v1472
        %v1503 = vunpack.c.l.b16 %v1473
        %v1504 = vunpack.c.l.b16 %v1474
        %v1505 = vunpack.c.l.b16 %v1475
        %v1506 = vunpack.c.l.b16 %v1476
        %v1507 = vunpack.c.l.b16 %v1477
        %v1508 = vunpack.c.l.b16 %v1478
        %v1509 = vunpack.c.l.b16 %v1479
        %v1510 = vunpack.c.l.b16 %v1480
        %v1511 = vunpack.c.l.b16 %v1481
        %v1512 = vpack.c.b16 %v1503, %v1502
        %v1513 = vpack.c.b16 %v1505, %v1504
        %v1514 = vpack.c.b16 %v1507, %v1506
        %v1515 = vpack.c.b16 %v1509, %v1508
        %v1516 = vpack.c.b16 %v1511, %v1510
        %vm1521 = vcmask 613376
        %v1523 = vsel %vm1521, %v1490, 0
        %v1526 = vsel %vm1521, %v1491, 0
        %vm1528 = vcmask 1044480
        %vm1529 = vcmask 1045504
        %v1530 = vsel %vm1528, 4294967295, 65535
        %v1531 = vsel %vm1529, %v1530, 0
        %v1533 = vand.u32 %v1516, %v1531
        %1535 = vmatpush.bf16.msra.mxu0 0
        %1536 = vmatpush.bf16.msra.mxu0 0
        %1537 = vmatpush.bf16.msra.mxu0 0
        %1538 = vmatpush.bf16.msra.mxu0 %v1533
        %1539 = vmatpush.bf16.msra.mxu0 %v1515
        %1540 = vmatpush.bf16.msra.mxu0 %v1514
        %1541 = vmatpush.bf16.msra.mxu0 %v1513
        %1542 = vmatpush.bf16.msra.mxu0 %v1512
        %1543 = vmatmul.bf16.gmra.mxu0 %v1523
        %v1544 = vpop.f32.mrf.mxu0
        %v1545 = vadd.f32 0.0, %v1544
        %v1546 = vpop.f32.mrf.mxu0
        %v1547 = vadd.f32 0.0, %v1546
        %1548 = vmatmul.bf16.gmra.mxu0 %v1526
        %v1549 = vpop.f32.mrf.mxu0
        %v1550 = vadd.f32 0.0, %v1549
        %v1551 = vpop.f32.mrf.mxu0
        %v1552 = vadd.f32 0.0, %v1551
        %1553 = vdwg.mxu0
        %v1554 = vld [vmem:[%s2] sm:$0x1]
        %v1556 = vperm.slane %v1554, 0
        %v1558 = vmul.f32 %v1545, %v1556
        %v1559 = vmul.f32 %v1547, %v1556
        %v1560 = vmul.f32 %v1550, %v1556
        %v1561 = vmul.f32 %v1552, %v1556
        %v1562 = vld [vmem:[%s3] sm:$0x1]
        %v1564 = vperm.slane %v1562, 0
        %v1566 = vadd.f32 %v1558, %v1564
        %v1567 = vadd.f32 %v1559, %v1564
        %v1568 = vadd.f32 %v1560, %v1564
        %v1569 = vadd.f32 %v1561, %v1564
        %v1570 = vmul.f32 %v1566, 3.8146973e-06
        %v1571 = vmul.f32 %v1567, 3.8146973e-06
        %v1572 = vmul.f32 %v1568, 3.8146973e-06
        %v1573 = vmul.f32 %v1569, 3.8146973e-06
        %v1574 = vadd.f32 %v1570, 0.5
        %v1575 = vadd.f32 %v1571, 0.5
        %v1576 = vadd.f32 %v1572, 0.5
        %v1577 = vadd.f32 %v1573, 0.5
        %v1578 = vfloor.f32 %v1574
        %v1579 = vfloor.f32 %v1575
        %v1580 = vfloor.f32 %v1576
        %v1581 = vfloor.f32 %v1577
        %v1582 = vmax.f32 %v1578, 0.0
        %v1583 = vmax.f32 %v1579, 0.0
        %v1584 = vmax.f32 %v1580, 0.0
        %v1585 = vmax.f32 %v1581, 0.0
        %v1586 = vmin.f32 %v1582, 261120.0
        %v1587 = vmin.f32 %v1583, 261120.0
        %v1588 = vmin.f32 %v1584, 261120.0
        %v1589 = vmin.f32 %v1585, 261120.0
        %v1590 = vmul.f32 %v1586, 512.0
        %v1591 = vmul.f32 %v1587, 512.0
        %v1592 = vmul.f32 %v1588, 512.0
        %v1593 = vmul.f32 %v1589, 512.0
        %v1594 = vround.ne.pseudo %v1590
        %v1595 = vround.ne.pseudo %v1591
        %v1596 = vround.ne.pseudo %v1592
        %v1597 = vround.ne.pseudo %v1593
        %v1598 = vmul.f32 %v1594, 1.9073486e-06
        %v1599 = vmul.f32 %v1595, 1.9073486e-06
        %v1600 = vmul.f32 %v1596, 1.9073486e-06
        %v1601 = vmul.f32 %v1597, 1.9073486e-06
        %v1602 = vadd.f32 %v1598, 0.5
        %v1603 = vadd.f32 %v1599, 0.5
        %v1604 = vadd.f32 %v1600, 0.5
        %v1605 = vadd.f32 %v1601, 0.5
        %v1606 = vfloor.f32 %v1602
        %v1607 = vfloor.f32 %v1603
        %v1608 = vfloor.f32 %v1604
        %v1609 = vfloor.f32 %v1605
        %v1610 = vpack.c.bf16 %v1606, %v1606
        %v1611 = vpack.c.bf16 %v1607, %v1607
        %v1612 = vpack.c.bf16 %v1608, %v1608
        %v1613 = vpack.c.bf16 %v1609, %v1609
        %vm1614 = vcmask 60416
        %1615 = vst.msk [vmem:[%s214] sm:$0xf] %vm1614, %v1610
        %1616 = vst.msk [vmem:[%s214 + $0x4] sm:$0xf] %vm1614, %v1611
        %1617 = vst.msk [vmem:[%s214 + $0x8] sm:$0xf] %vm1614, %v1612
        %1618 = vst.msk [vmem:[%s214 + $0xc] sm:$0xf] %vm1614, %v1613
        %s1619 = sand.u32 %s131, 1
        %s1620 = scalar_lea.sflag [#allocation3], %s1619
        %s1621 = sand.u32 %s131, 1
        %s1622 = smul.addr %s1621, 16
        %s1623 = scalar_lea.vmem [#allocation2], %s1622
        // Predicated region
        $region37: #{tpu_custom_call.1} parent=35 // pred_check
          %p1624 = pneg %p141
        $region38: #{tpu_custom_call.1} parent=35 // pred_check_branch
          %1626 = sbr.rel (%p1624) target = $region40
        $region39: #{tpu_custom_call.1} parent=35 // pred_region
          %s1627 = smul.u32 4, %s23
          %1629 = vsyncadd %s1620, 0
          %s1630 = smul.addr %s22, 8
          %s1631 = sadd.s32 %s1627, %s1630
          %s1632 = smul.addr %s1631, 4
          %s1633 = scalar_lea.hbm %s4, %s1632
          %s1634 = sshll.u32 %s1623, 4
          %s1635 = int_to_ptr.vmem [resolvable:$true] %s1634
          %s1636 = sshll.u32 %s1633, 4
          %s1637 = int_to_ptr.hbm [resolvable:$true] %s1636
          %1642 = dma.vmem_to_hbm [thread:$0]  %s1635, 256, %s1637, %s1620, 64, 64, 4
        $region40: #{tpu_custom_call.1} parent=35 // pred_fallthru
          _
      $region36: #{tpu_custom_call.1} parent=5 // pred_fallthru
        _
      %p1643 = scmp.le.s32.totalorder 2, %s13
      // Predicated region
      $region41: #{tpu_custom_call.1} parent=5 // pred_check
        %p1644 = pneg %p1643
      $region42: #{tpu_custom_call.1} parent=5 // pred_check_branch
        %1646 = sbr.rel (%p1644) target = $region44
      $region43: #{tpu_custom_call.1} parent=5 // pred_region
        %s1647 = ssub.s32 %s13, 2
        // Predicated region
        $region45: #{tpu_custom_call.1} parent=43 // pred_check
          %p1648 = pneg %p147
        $region46: #{tpu_custom_call.1} parent=43 // pred_check_branch
          %1650 = sbr.rel (%p1648) target = $region48
        $region47: #{tpu_custom_call.1} parent=43 // pred_region
          %s1651 = sand.u32 %s132, 1
          %s1652 = scalar_lea.sflag [#allocation3], %s1651
          %s1653 = sand.u32 %s132, 1
          %s1654 = smul.addr %s1653, 16
          %s1655 = scalar_lea.vmem [#allocation2], %s1654
          %1657 = dma.done %s1652, 256
        $region48: #{tpu_custom_call.1} parent=43 // pred_fallthru
          _
      $region44: #{tpu_custom_call.1} parent=5 // pred_fallthru
        _
    $region6: #{tpu_custom_call.1} parent=1 // loop_footer
      %s17 = sadd.s32 1, %s13
    $region7: #{tpu_custom_call.1} parent=1 // loop_footer_branch
      %12 = sbr.rel target = $region3
    $region8: #{tpu_custom_call.1} parent=1 // loop_exit
      _
    %1658 = vsyncpa [#allocation3], 1
    %s1659 = scalar_lea.sflag [#allocation3], 1
    %1660 = vsyncpa %s1659, 1

</llo_original>
